<compile_context>
chip_gen: v7x
topology: tpu7x:2x2x1
jax: 0.10.0
libtpu: 0.0.40
codegen_flags: <defaults>
</compile_context>

<pallas_src>
import functools

import numpy as np

import jax
import jax.numpy as jnp
from jax import lax
from jax.experimental import pallas as pl
from jax.experimental.pallas import tpu as pltpu

NEG = -1.0e30   # finite "-inf" keeps the log-sum-exp NaN-free
BB = 8          # CTC samples per grid step (fills the 8 sublanes of a vreg)


def _round_up(x, m):
    return (x + m - 1) // m * m


# ---------------------------------------------------------------------------
# CTC kernel: one grid step = BB samples.  Per sample b:
#   loss_b = -log p(gloss_b | logits_b) / max(gloss_len_b, 1)
# ---------------------------------------------------------------------------
def ctc_kernel(tmax_ref,                                   # scalar prefetch (SMEM)
               logits_ref, ext_ref, ext3_ref, sgn_ref, gls_ref,  # VMEM inputs
               loss_ref,                                   # VMEM output (BB, 1)
               emit_ref, alpha_ref,                        # VMEM scratch
               *, blank_id):
    bb, T, V = logits_ref.shape
    s_pad = ext_ref.shape[1]

    raw = logits_ref[...]
    x = raw.astype(jnp.float32)                                  # (BB, T, V)

    # ---- log-sum-exp over vocab (f32, in-kernel upcast) ----
    m = jnp.max(x, axis=-1, keepdims=True)
    lse = m + jnp.log(jnp.sum(jnp.exp(x - m), axis=-1, keepdims=True))  # (BB,T,1)

    # ---- emissions at extended-label positions ----
    # One-hot built in-kernel; matmul on raw logits (bf16 MXU, one-hot exact),
    # then subtract lse: sum_v (x_v - lse) * oh[v,s] == picked[s] - lse.
    v_iota = lax.broadcasted_iota(jnp.int32, (bb, V, s_pad), 1)
    oh_t = (ext3_ref[...] == v_iota).astype(jnp.bfloat16)        # (BB, V, S_pad)
    picked = jnp.einsum("btv,bvs->bts", raw.astype(jnp.bfloat16), oh_t,
                        preferred_element_type=jnp.float32)      # (BB, T, S_pad)
    emit = picked - lse                                          # (BB, T, S_pad)
    # (BB, T, S_pad) -> (BB*T, S_pad): layout-trivial (T multiple of 8), so the
    # per-step stride-T load below gathers a dense (BB, S_pad) tile.
    emit_ref[...] = emit.reshape(bb * T, s_pad)

    # ---- masks (hoisted out of the time loop) ----
    ext2 = ext_ref[...]                                          # (BB, S_pad) int32
    ext2_f = ext2.astype(jnp.float32)
    s_iota = lax.broadcasted_iota(jnp.int32, (bb, s_pad), 1)
    mask1 = s_iota >= 1
    mask2 = ((s_iota >= 2) & (ext2 != blank_id)
             & (ext2_f != pltpu.roll(ext2_f, 2, axis=1)))        # CTC skip rule
    sgn = sgn_ref[...]                                           # (BB, 1) int32
    gls = gls_ref[...]                                           # (BB, 1) int32

    # ---- alpha init (t = 0) ----
    e0 = emit_ref[pl.ds(0, bb, stride=T), :]                     # (BB, S_pad)
    alpha_ref[...] = jnp.where(s_iota <= 1, e0, NEG)

    t_max = jnp.minimum(tmax_ref[pl.program_id(0)], T)

    # ---- alpha recursion, bounded at the block's max(sign_len) ----
    @pl.loop(1, t_max)
    def _(t):
        alpha = alpha_ref[...]
        a1 = jnp.where(mask1, pltpu.roll(alpha, 1, axis=1), NEG)     # alpha[s-1]
        a2 = jnp.where(mask2, pltpu.roll(alpha, 2, axis=1), NEG)     # alpha[s-2]
        mx = jnp.maximum(jnp.maximum(alpha, a1), a2)
        lse3 = mx + jnp.log(jnp.exp(alpha - mx) + jnp.exp(a1 - mx)
                            + jnp.exp(a2 - mx))
        e_t = emit_ref[pl.ds(t, bb, stride=T), :]                    # (BB, S_pad)
        alpha_ref[...] = jnp.where(t < sgn, lse3 + e_t, alpha)       # per-row freeze

    # ---- finalize: logsumexp of the last two extended states, per sample ----
    alpha = alpha_ref[...]
    s_last = 2 * gls                                             # (BB, 1)
    v1 = jnp.max(jnp.where(s_iota == s_last, alpha, NEG), axis=1, keepdims=True)
    v2 = jnp.max(jnp.where(s_iota == (s_last - 1), alpha, NEG), axis=1, keepdims=True)
    mx = jnp.maximum(v1, v2)
    nll = -(mx + jnp.log(jnp.exp(v1 - mx) + jnp.exp(v2 - mx)))   # (BB, 1)
    # nn.CTCLoss(reduction='mean'): per-sample divide by target length
    # TODO(synk): no zero_infinity clamp (matches PyTorch CTCLoss default).
    loss_ref[...] = nll / jnp.maximum(gls, 1).astype(jnp.float32)


def ctc_loss_pallas(gloss_logits, gloss, sgn_len, gloss_len, *, blank_id,
                    s_pad=128):
    B, T, V = gloss_logits.shape
    l_max = gloss.shape[1]
    assert 2 * l_max + 1 <= s_pad, "extended label length exceeds S_pad"

    B_pad = _round_up(max(B, 1), BB)
    T_pad = _round_up(T, 8)
    if (B_pad, T_pad) != (B, T):
        gloss_logits = jnp.pad(gloss_logits,
                               ((0, B_pad - B), (0, T_pad - T), (0, 0)))
    sgn = jnp.pad(sgn_len.astype(jnp.int32), (0, B_pad - B))
    gls = jnp.pad(gloss_len.astype(jnp.int32), (0, B_pad - B))
    gloss_p = jnp.pad(gloss.astype(jnp.int32), ((0, B_pad - B), (0, 0)))

    # blank-interleaved extended labels (only S_pad int32 per sample goes to HBM)
    s_idx = jnp.arange(s_pad)
    ext = jnp.full((B_pad, s_pad), blank_id, jnp.int32)
    ext = ext.at[:, 1:2 * l_max:2].set(gloss_p)
    valid_lbl = (s_idx[None, :] % 2 == 1) & ((s_idx[None, :] // 2) < gls[:, None])
    ext = jnp.where(valid_lbl, ext, blank_id)

    num_blocks = B_pad // BB
    block_tmax = jnp.max(sgn.reshape(num_blocks, BB), axis=1).astype(jnp.int32)

    grid_spec = pltpu.PrefetchScalarGridSpec(
        num_scalar_prefetch=1,
        grid=(num_blocks,),
        in_specs=[
            pl.BlockSpec((BB, T_pad, V), lambda i, tm: (i, 0, 0)),   # logits (native dtype)
            pl.BlockSpec((BB, s_pad), lambda i, tm: (i, 0)),          # ext labels (lane layout)
            pl.BlockSpec((BB, 1, s_pad), lambda i, tm: (i, 0, 0)),    # ext labels (for one-hot)
            pl.BlockSpec((BB, 1), lambda i, tm: (i, 0)),              # sign_len
            pl.BlockSpec((BB, 1), lambda i, tm: (i, 0)),              # gloss_len
        ],
        out_specs=pl.BlockSpec((BB, 1), lambda i, tm: (i, 0)),
        scratch_shapes=[pltpu.VMEM((BB * T_pad, s_pad), jnp.float32),
                        pltpu.VMEM((BB, s_pad), jnp.float32)],
    )
    per_sample = pl.pallas_call(
        functools.partial(ctc_kernel, blank_id=blank_id),
        out_shape=jax.ShapeDtypeStruct((B_pad, 1), jnp.float32),
        grid_spec=grid_spec,
        compiler_params=pltpu.CompilerParams(
            dimension_semantics=("parallel",),          # v7x: shard blocks over 2 TCs
            vmem_limit_bytes=32 * 1024 * 1024),
    )(block_tmax, gloss_logits, ext, ext.reshape(B_pad, 1, s_pad),
      sgn.reshape(B_pad, 1), gls.reshape(B_pad, 1))

    valid = jnp.arange(B_pad) < B
    return jnp.sum(jnp.where(valid, per_sample[:, 0], 0.0)) / B


# ---------------------------------------------------------------------------
# CE kernel (XentLoss, smoothing=0): per row-tile, summed NLL over non-pad
# tokens + token count, without materializing the full log-softmax tile.
# ---------------------------------------------------------------------------
def ce_kernel(logits_ref, tgt_ref, out_ref, *, pad_id):
    x = logits_ref[...].astype(jnp.float32)                       # (TILE_N, V)
    m = jnp.max(x, axis=-1, keepdims=True)
    lse = m + jnp.log(jnp.sum(jnp.exp(x - m), axis=-1, keepdims=True))  # (TILE_N,1)
    tgt = tgt_ref[...]                                            # (TILE_N, 1)
    v_iota = lax.broadcasted_iota(jnp.int32, x.shape, 1)
    picked = jnp.sum(jnp.where(v_iota == tgt, x, 0.0), axis=-1, keepdims=True)
    mask = (tgt != pad_id).astype(jnp.float32)
    nll = (lse - picked) * mask
    out_ref[0, 0] = jnp.sum(nll)     # partial summed NLL over non-pad tokens
    out_ref[0, 1] = jnp.sum(mask)    # partial token count


def ce_loss_pallas(dec_logits, text_trg, *, pad_id, tile_n=256):
    B, L, V = dec_logits.shape
    N = B * L
    x = dec_logits.reshape(N, V)                  # native dtype, cast in-kernel
    tgt = text_trg.reshape(N, 1).astype(jnp.int32)

    # Keep each (tile_n, V) input tile within ~4 MiB so double-buffering fits
    # comfortably in the scoped VMEM limit even for large vocabularies.
    tile_budget = 4 * 1024 * 1024
    tile_n = min(tile_n, max(8, (tile_budget // (V * 4)) // 8 * 8))
    tile_n = min(tile_n, _round_up(N, 8))
    N_pad = _round_up(N, tile_n)
    if N_pad != N:
        x = jnp.pad(x, ((0, N_pad - N), (0, 0)))
        tgt = jnp.pad(tgt, ((0, N_pad - N), (0, 0)), constant_values=pad_id)
    num_tiles = N_pad // tile_n

    out = pl.pallas_call(
        functools.partial(ce_kernel, pad_id=pad_id),
        out_shape=jax.ShapeDtypeStruct((num_tiles, 2), jnp.float32),
        grid=(num_tiles,),
        in_specs=[pl.BlockSpec((tile_n, V), lambda i: (i, 0)),
                  pl.BlockSpec((tile_n, 1), lambda i: (i, 0))],
        out_specs=pl.BlockSpec((1, 2), lambda i: (i, 0),
                               memory_space=pltpu.MemorySpace.SMEM),
        compiler_params=pltpu.CompilerParams(
            dimension_semantics=("parallel",),
            vmem_limit_bytes=32 * 1024 * 1024),
    )(x, tgt)
    return jnp.sum(out[:, 0]), jnp.sum(out[:, 1])


# ---------------------------------------------------------------------------
# CtcCeLoss.forward equivalent
# ---------------------------------------------------------------------------
def ctc_ce_loss_forward(sample, model_fn, *, blank_id, pad_id,
                        reg_loss_weight=1.0, tran_loss_weight=1.0):
    gloss_logits, decoder_outputs = model_fn(
        sample["sign_feature"], sample["sign_len"],
        sample["text_inp"], sample["text_len"])

    reg_ctc_loss = ctc_loss_pallas(
        gloss_logits, sample["gloss"], sample["sign_len"], sample["gloss_len"],
        blank_id=blank_id) * reg_loss_weight

    # TODO(synk): label smoothing > 0 in XentLoss is not implemented (pure NLL path).
    ce_sum, num_tokens = ce_loss_pallas(decoder_outputs, sample["text_trg"],
                                        pad_id=pad_id)
    tran_loss = ce_sum * tran_loss_weight / (num_tokens + 1e-8)
    return reg_ctc_loss, tran_loss


# ---------------------------------------------------------------------------
# Pure numpy references (correctness guard for the Pallas kernels)
# ---------------------------------------------------------------------------
def ctc_loss_ref(gloss_logits, gloss, gloss_len, sgn_len, blank_id):
    logp = np.asarray(jax.nn.log_softmax(jnp.asarray(gloss_logits), axis=-1),
                      dtype=np.float64)
    losses = []
    for b in range(logp.shape[0]):
        Lb, Tb = int(gloss_len[b]), int(sgn_len[b])
        ext = [blank_id]
        for c in np.asarray(gloss)[b, :Lb]:
            ext += [int(c), blank_id]
        S = len(ext)
        alpha = np.full(S, -np.inf)
        alpha[0] = logp[b, 0, ext[0]]
        if S > 1:
            alpha[1] = logp[b, 0, ext[1]]
        for t in range(1, Tb):
            prev = alpha.copy()
            for s in range(S):
                acc = prev[s]
                if s >= 1:
                    acc = np.logaddexp(acc, prev[s - 1])
                if s >= 2 and ext[s] != blank_id and ext[s] != ext[s - 2]:
                    acc = np.logaddexp(acc, prev[s - 2])
                alpha[s] = acc + logp[b, t, ext[s]]
        tot = np.logaddexp(alpha[-1], alpha[-2]) if S >= 2 else alpha[-1]
        losses.append(-tot / max(Lb, 1))
    return float(np.mean(losses))


def ce_loss_ref(dec_logits, text_trg, pad_id):
    logp = np.asarray(jax.nn.log_softmax(jnp.asarray(dec_logits), axis=-1),
                      dtype=np.float64)
    trg = np.asarray(text_trg)
    s, n = 0.0, 0
    for b in range(trg.shape[0]):
        for l in range(trg.shape[1]):
            t = int(trg[b, l])
            if t != pad_id:
                s += -logp[b, l, t]
                n += 1
    return s, n


if __name__ == "__main__":
    # ---- deterministic synthetic setup ----
    B, T, D_SIGN = 2, 16, 32
    V_GLOSS, V_TEXT, H = 128, 128, 32
    LG_MAX, L_TEXT = 4, 8
    BLANK_ID = 0      # gls_text_vocab.gloss2idx('<blank>')
    PAD_ID = 1        # gls_text_vocab.token2idx('<pad>')

    key = jax.random.PRNGKey(0)
    k1, k2, k3, k4, k5 = jax.random.split(key, 5)

    sign_feature = jax.random.normal(k1, (B, T, D_SIGN), jnp.float32)
    sign_len = jnp.array([16, 12], jnp.int32)
    gloss = jnp.array([[5, 9, 3, 0],
                       [7, 2, 2, 11]], jnp.int32)
    gloss_len = jnp.array([3, 4], jnp.int32)
    text_inp = jax.random.randint(k2, (B, L_TEXT), 2, V_TEXT, dtype=jnp.int32)
    text_trg = jnp.array([[4, 7, 9, 3, PAD_ID, PAD_ID, PAD_ID, PAD_ID],
                          [5, 6, 2, 8, 10, 3, PAD_ID, PAD_ID]], jnp.int32)
    text_len = jnp.array([4, 6], jnp.int32)

    sample = dict(name=["v0", "v1"], sign_feature=sign_feature, sign_len=sign_len,
                  gloss=gloss, gloss_len=gloss_len, text_inp=text_inp,
                  text_trg=text_trg, text_len=text_len)

    # TODO(synk): the real `model` is external to CtcCeLoss; replaced by a
    # deterministic linear stand-in producing the same output shapes.
    W_g = 0.05 * jax.random.normal(k3, (D_SIGN, V_GLOSS), jnp.float32)
    emb = 0.05 * jax.random.normal(k4, (V_TEXT, H), jnp.float32)
    W_d = 0.05 * jax.random.normal(k5, (H, V_TEXT), jnp.float32)

    def model_fn(sgn_feat, sgn_len_, txt_inp, txt_len_):
        gloss_logits = jnp.einsum("btd,dv->btv", sgn_feat, W_g)   # (B, T, V_gloss)
        dec_h = emb[txt_inp]                                      # (B, L, H)
        decoder_outputs = jnp.einsum("blh,hv->blv", dec_h, W_d)   # (B, L, V_text)
        return gloss_logits, decoder_outputs

    reg_ctc_loss, tran_loss = ctc_ce_loss_forward(
        sample, model_fn, blank_id=BLANK_ID, pad_id=PAD_ID,
        reg_loss_weight=1.0, tran_loss_weight=1.0)
    jax.block_until_ready((reg_ctc_loss, tran_loss))

    # ---- reference check (bf16 emission matmul => loose CTC tolerance) ----
    gl_ref, do_ref = model_fn(sign_feature, sign_len, text_inp, text_len)
    ref_ctc = ctc_loss_ref(gl_ref, gloss, gloss_len, sign_len, BLANK_ID)
    ce_s, ce_n = ce_loss_ref(do_ref, text_trg, PAD_ID)
    ref_tran = ce_s / (ce_n + 1e-8)
    np.testing.assert_allclose(float(reg_ctc_loss), ref_ctc, rtol=5e-2, atol=5e-2)
    np.testing.assert_allclose(float(tran_loss), ref_tran, rtol=2e-3, atol=1e-3)

    # TODO(synk): inference_tf (tf.nn.ctc_beam_search_decoder) has no Pallas equivalent; omitted.
    print("KERNEL_OK")
</pallas_src>

<mosaic_0001>
module attributes {stable_mosaic.version = 11 : i64} {
  func.func @ctc_kernel(%arg0: i32, %arg1: memref<1xi32, #tpu.memory_space<smem>>, %arg2: memref<8x16x128xf32, #tpu.memory_space<vmem>>, %arg3: memref<8x128xi32, #tpu.memory_space<vmem>>, %arg4: memref<8x1x128xi32, #tpu.memory_space<vmem>>, %arg5: memref<8x1xi32, #tpu.memory_space<vmem>>, %arg6: memref<8x1xi32, #tpu.memory_space<vmem>>, %arg7: memref<8x1xf32, #tpu.memory_space<vmem>>, %arg8: memref<128x128xf32, #tpu.memory_space<vmem>>, %arg9: memref<8x128xf32, #tpu.memory_space<vmem>>) attributes {dimension_semantics = [#tpu.dimension_semantics<parallel>], iteration_bounds = array<i64: 1>, scalar_prefetch = 1 : i64, scratch_operands = 2 : i64, tpu.core_type = #tpu.core_type<tc>, window_params = [{transform_indices = @transform_0, window_bounds = array<i64: 8, 16, 128>}, {transform_indices = @transform_1, window_bounds = array<i64: 8, 128>}, {transform_indices = @transform_2, window_bounds = array<i64: 8, 1, 128>}, {transform_indices = @transform_3, window_bounds = array<i64: 8, 1>}, {transform_indices = @transform_4, window_bounds = array<i64: 8, 1>}, {transform_indices = @transform_5, window_bounds = array<i64: 8, 1>}]} {
    %c0 = arith.constant 0 : index
    %c0_0 = arith.constant 0 : index
    %c0_1 = arith.constant 0 : index
    %0 = vector.load %arg2[%c0, %c0_0, %c0_1] : memref<8x16x128xf32, #tpu.memory_space<vmem>>, vector<8x16x128xf32>
    %cst = arith.constant dense<0xFF800000> : vector<8x16xf32>
    %1 = vector.multi_reduction <maximumf>, %0, %cst [2] : vector<8x16x128xf32> to vector<8x16xf32>
    %2 = vector.shape_cast %1 : vector<8x16xf32> to vector<8x16x1xf32>
    %3 = vector.broadcast %2 : vector<8x16x1xf32> to vector<8x16x128xf32>
    %4 = arith.subf %0, %3 : vector<8x16x128xf32>
    %5 = math.exp %4 : vector<8x16x128xf32>
    %cst_2 = arith.constant dense<0.000000e+00> : vector<8x16xf32>
    %6 = vector.multi_reduction <add>, %5, %cst_2 [2] : vector<8x16x128xf32> to vector<8x16xf32>
    %7 = vector.shape_cast %6 : vector<8x16xf32> to vector<8x16x1xf32>
    %8 = math.log %7 : vector<8x16x1xf32>
    %9 = arith.addf %2, %8 : vector<8x16x1xf32>
    %10 = tpu.iota {dimensions = array<i32: 1>} : vector<8x128x128xi32>
    %c0_3 = arith.constant 0 : index
    %c0_4 = arith.constant 0 : index
    %c0_5 = arith.constant 0 : index
    %11 = vector.load %arg4[%c0_3, %c0_4, %c0_5] : memref<8x1x128xi32, #tpu.memory_space<vmem>>, vector<8x1x128xi32>
    %12 = vector.broadcast %11 : vector<8x1x128xi32> to vector<8x128x128xi32>
    %13 = arith.cmpi eq, %12, %10 : vector<8x128x128xi32>
    %14 = arith.extui %13 : vector<8x128x128xi1> to vector<8x128x128xi32>
    %15 = arith.sitofp %14 : vector<8x128x128xi32> to vector<8x128x128xf32>
    %16 = arith.truncf %15 : vector<8x128x128xf32> to vector<8x128x128xbf16>
    %17 = arith.truncf %0 : vector<8x16x128xf32> to vector<8x16x128xbf16>
    "tpu.trace_start"() <{level = 10 : i32, message = "btv,bvs->bts"}> : () -> ()
    %cst_6 = arith.constant dense<0.000000e+00> : vector<8x16x128xf32>
    %18 = tpu.matmul %17, %16, %cst_6 {dimension_numbers = #tpu.dot_dimension_numbers<[2], [1], [1], [2], [0, 0, 0, 1, 1, 2], [0], [0]>} : vector<8x16x128xbf16>, vector<8x128x128xbf16>, vector<8x16x128xf32> -> vector<8x16x128xf32>
    "tpu.trace_stop"() : () -> ()
    %19 = vector.broadcast %9 : vector<8x16x1xf32> to vector<8x16x128xf32>
    %20 = arith.subf %18, %19 : vector<8x16x128xf32>
    %21 = vector.shape_cast %20 : vector<8x16x128xf32> to vector<128x128xf32>
    %c0_7 = arith.constant 0 : index
    %c0_8 = arith.constant 0 : index
    %22 = vector.load %arg8[%c0_7, %c0_8] : memref<128x128xf32, #tpu.memory_space<vmem>>, vector<128x128xf32>
    tpu.vector_store %arg8[%c0_7, %c0_8], %21 {strides = array<i32>} : memref<128x128xf32, #tpu.memory_space<vmem>>, vector<128x128xf32>,
    %c0_9 = arith.constant 0 : index
    %c0_10 = arith.constant 0 : index
    %23 = vector.load %arg3[%c0_9, %c0_10] : memref<8x128xi32, #tpu.memory_space<vmem>>, vector<8x128xi32>
    %24 = arith.sitofp %23 : vector<8x128xi32> to vector<8x128xf32>
    %25 = tpu.iota {dimensions = array<i32: 1>} : vector<8x128xi32>
    %c1_i32 = arith.constant 1 : i32
    %26 = vector.broadcast %c1_i32 : i32 to vector<8x128xi32>
    %27 = arith.cmpi sge, %25, %26 : vector<8x128xi32>
    %c2_i32 = arith.constant 2 : i32
    %28 = vector.broadcast %c2_i32 : i32 to vector<8x128xi32>
    %29 = arith.cmpi sge, %25, %28 : vector<8x128xi32>
    %c0_i32 = arith.constant 0 : i32
    %30 = vector.broadcast %c0_i32 : i32 to vector<8x128xi32>
    %31 = arith.cmpi ne, %23, %30 : vector<8x128xi32>
    %32 = arith.andi %29, %31 : vector<8x128xi1>
    %c2_i32_11 = arith.constant 2 : i32
    %33 = tpu.dynamic_rotate %24 by %c2_i32_11 dim 1 : vector<8x128xf32>, i32 -> vector<8x128xf32>
    %34 = arith.cmpf one, %24, %33 : vector<8x128xf32>
    %35 = arith.andi %32, %34 : vector<8x128xi1>
    %c0_12 = arith.constant 0 : index
    %c0_13 = arith.constant 0 : index
    %36 = vector.load %arg5[%c0_12, %c0_13] : memref<8x1xi32, #tpu.memory_space<vmem>>, vector<8x1xi32>
    %c0_14 = arith.constant 0 : index
    %c0_15 = arith.constant 0 : index
    %37 = vector.load %arg6[%c0_14, %c0_15] : memref<8x1xi32, #tpu.memory_space<vmem>>, vector<8x1xi32>
    %c0_16 = arith.constant 0 : index
    %c0_17 = arith.constant 0 : index
    %38 = tpu.strided_load %arg8[%c0_16, %c0_17] {strides = array<i32: 16, 1>} : memref<128x128xf32, #tpu.memory_space<vmem>>, vector<8x128xf32>
    %c1_i32_18 = arith.constant 1 : i32
    %39 = vector.broadcast %c1_i32_18 : i32 to vector<8x128xi32>
    %40 = arith.cmpi sle, %25, %39 : vector<8x128xi32>
    %cst_19 = arith.constant -1.000000e+30 : f32
    %41 = vector.broadcast %cst_19 : f32 to vector<8x128xf32>
    %42 = arith.select %40, %38, %41 : vector<8x128xi1>, vector<8x128xf32>
    %c0_20 = arith.constant 0 : index
    %c0_21 = arith.constant 0 : index
    %43 = vector.load %arg9[%c0_20, %c0_21] : memref<8x128xf32, #tpu.memory_space<vmem>>, vector<8x128xf32>
    tpu.vector_store %arg9[%c0_20, %c0_21], %42 {strides = array<i32>} : memref<8x128xf32, #tpu.memory_space<vmem>>, vector<8x128xf32>,
    %44 = arith.index_cast %arg0 : i32 to index
    %45 = memref.load %arg1[%44] : memref<1xi32, #tpu.memory_space<smem>>
    %c16_i32 = arith.constant 16 : i32
    %46 = arith.minsi %45, %c16_i32 : i32
    %c1_i32_22 = arith.constant 1 : i32
    %47 = arith.subi %46, %c1_i32_22 : i32
    %c1_i32_23 = arith.constant 1 : i32
    %c1_i32_24 = arith.constant 1 : i32
    %48 = arith.subi %c1_i32_23, %c1_i32_24 : i32
    %49 = arith.addi %47, %48 : i32
    %c1_i32_25 = arith.constant 1 : i32
    %50 = arith.divsi %49, %c1_i32_25 : i32
    %c1_i32_26 = arith.constant 1 : i32
    %c1_i32_27 = arith.constant 1 : i32
    %c0_i32_28 = arith.constant 0 : i32
    %51 = arith.subi %50, %c0_i32_28 : i32
    %52 = arith.addi %c0_i32_28, %51 : i32
    %c1_i32_29 = arith.constant 1 : i32
    scf.for %arg10 = %c0_i32_28 to %52 step %c1_i32_29  : i32 {
      %85 = arith.muli %arg10, %c1_i32_26 : i32
      %86 = arith.addi %c1_i32_27, %85 : i32
      %c0_42 = arith.constant 0 : index
      %c0_43 = arith.constant 0 : index
      %87 = vector.load %arg9[%c0_42, %c0_43] : memref<8x128xf32, #tpu.memory_space<vmem>>, vector<8x128xf32>
      %c1_i32_44 = arith.constant 1 : i32
      %88 = tpu.dynamic_rotate %87 by %c1_i32_44 dim 1 : vector<8x128xf32>, i32 -> vector<8x128xf32>
      %cst_45 = arith.constant -1.000000e+30 : f32
      %89 = vector.broadcast %cst_45 : f32 to vector<8x128xf32>
      %90 = arith.select %27, %88, %89 : vector<8x128xi1>, vector<8x128xf32>
      %c2_i32_46 = arith.constant 2 : i32
      %91 = tpu.dynamic_rotate %87 by %c2_i32_46 dim 1 : vector<8x128xf32>, i32 -> vector<8x128xf32>
      %cst_47 = arith.constant -1.000000e+30 : f32
      %92 = vector.broadcast %cst_47 : f32 to vector<8x128xf32>
      %93 = arith.select %35, %91, %92 : vector<8x128xi1>, vector<8x128xf32>
      %94 = arith.maximumf %87, %90 : vector<8x128xf32>
      %95 = arith.maximumf %94, %93 : vector<8x128xf32>
      %96 = arith.subf %87, %95 : vector<8x128xf32>
      %97 = math.exp %96 : vector<8x128xf32>
      %98 = arith.subf %90, %95 : vector<8x128xf32>
      %99 = math.exp %98 : vector<8x128xf32>
      %100 = arith.addf %97, %99 : vector<8x128xf32>
      %101 = arith.subf %93, %95 : vector<8x128xf32>
      %102 = math.exp %101 : vector<8x128xf32>
      %103 = arith.addf %100, %102 : vector<8x128xf32>
      %104 = math.log %103 : vector<8x128xf32>
      %105 = arith.addf %95, %104 : vector<8x128xf32>
      %106 = arith.index_cast %86 : i32 to index
      %c0_48 = arith.constant 0 : index
      %107 = tpu.strided_load %arg8[%106, %c0_48] {strides = array<i32: 16, 1>} : memref<128x128xf32, #tpu.memory_space<vmem>>, vector<8x128xf32>
      %108 = vector.broadcast %86 : i32 to vector<8x1xi32>
      %109 = arith.cmpi slt, %108, %36 : vector<8x1xi32>
      %110 = arith.addf %105, %107 : vector<8x128xf32>
      %111 = vector.shape_cast %109 : vector<8x1xi1> to vector<8x1xi1>
      %112 = vector.broadcast %111 : vector<8x1xi1> to vector<8x128xi1>
      %113 = arith.select %112, %110, %87 : vector<8x128xi1>, vector<8x128xf32>
      %c0_49 = arith.constant 0 : index
      %c0_50 = arith.constant 0 : index
      %114 = vector.load %arg9[%c0_49, %c0_50] : memref<8x128xf32, #tpu.memory_space<vmem>>, vector<8x128xf32>
      tpu.vector_store %arg9[%c0_49, %c0_50], %113 {strides = array<i32>} : memref<8x128xf32, #tpu.memory_space<vmem>>, vector<8x128xf32>,
    }
    %c0_30 = arith.constant 0 : index
    %c0_31 = arith.constant 0 : index
    %53 = vector.load %arg9[%c0_30, %c0_31] : memref<8x128xf32, #tpu.memory_space<vmem>>, vector<8x128xf32>
    %c2_i32_32 = arith.constant 2 : i32
    %54 = vector.broadcast %c2_i32_32 : i32 to vector<8x1xi32>
    %55 = arith.muli %54, %37 : vector<8x1xi32>
    %56 = vector.broadcast %55 : vector<8x1xi32> to vector<8x128xi32>
    %57 = arith.cmpi eq, %25, %56 : vector<8x128xi32>
    %cst_33 = arith.constant -1.000000e+30 : f32
    %58 = vector.broadcast %cst_33 : f32 to vector<8x128xf32>
    %59 = arith.select %57, %53, %58 : vector<8x128xi1>, vector<8x128xf32>
    %cst_34 = arith.constant dense<0xFF800000> : vector<8xf32>
    %60 = vector.multi_reduction <maximumf>, %59, %cst_34 [1] : vector<8x128xf32> to vector<8xf32>
    %61 = vector.shape_cast %60 : vector<8xf32> to vector<8x1xf32>
    %c1_i32_35 = arith.constant 1 : i32
    %62 = vector.broadcast %c1_i32_35 : i32 to vector<8x1xi32>
    %63 = arith.subi %55, %62 : vector<8x1xi32>
    %64 = vector.broadcast %63 : vector<8x1xi32> to vector<8x128xi32>
    %65 = arith.cmpi eq, %25, %64 : vector<8x128xi32>
    %cst_36 = arith.constant -1.000000e+30 : f32
    %66 = vector.broadcast %cst_36 : f32 to vector<8x128xf32>
    %67 = arith.select %65, %53, %66 : vector<8x128xi1>, vector<8x128xf32>
    %cst_37 = arith.constant dense<0xFF800000> : vector<8xf32>
    %68 = vector.multi_reduction <maximumf>, %67, %cst_37 [1] : vector<8x128xf32> to vector<8xf32>
    %69 = vector.shape_cast %68 : vector<8xf32> to vector<8x1xf32>
    %70 = arith.maximumf %61, %69 : vector<8x1xf32>
    %71 = arith.subf %61, %70 : vector<8x1xf32>
    %72 = math.exp %71 : vector<8x1xf32>
    %73 = arith.subf %69, %70 : vector<8x1xf32>
    %74 = math.exp %73 : vector<8x1xf32>
    %75 = arith.addf %72, %74 : vector<8x1xf32>
    %76 = math.log %75 : vector<8x1xf32>
    %77 = arith.addf %70, %76 : vector<8x1xf32>
    %cst_38 = arith.constant 0.000000e+00 : f32
    %78 = vector.broadcast %cst_38 : f32 to vector<8x1xf32>
    %79 = arith.subf %78, %77 : vector<8x1xf32>
    %c1_i32_39 = arith.constant 1 : i32
    %80 = vector.broadcast %c1_i32_39 : i32 to vector<8x1xi32>
    %81 = arith.maxsi %37, %80 : vector<8x1xi32>
    %82 = arith.sitofp %81 : vector<8x1xi32> to vector<8x1xf32>
    %83 = arith.divf %79, %82 : vector<8x1xf32>
    %c0_40 = arith.constant 0 : index
    %c0_41 = arith.constant 0 : index
    %84 = vector.load %arg7[%c0_40, %c0_41] : memref<8x1xf32, #tpu.memory_space<vmem>>, vector<8x1xf32>
    tpu.vector_store %arg7[%c0_40, %c0_41], %83 {strides = array<i32>} : memref<8x1xf32, #tpu.memory_space<vmem>>, vector<8x1xf32>,
    return
  }
  func.func @transform_0(%arg0: i32, %arg1: memref<1xi32, #tpu.memory_space<smem>>) -> (i32, i32, i32) {
    %c0_i32 = arith.constant 0 : i32
    %c0_i32_0 = arith.constant 0 : i32
    %c0_i32_1 = arith.constant 0 : i32
    return %arg0, %c0_i32, %c0_i32_0 : i32, i32, i32
  }
  func.func @transform_1(%arg0: i32, %arg1: memref<1xi32, #tpu.memory_space<smem>>) -> (i32, i32) {
    %c0_i32 = arith.constant 0 : i32
    %c0_i32_0 = arith.constant 0 : i32
    return %arg0, %c0_i32 : i32, i32
  }
  func.func @transform_2(%arg0: i32, %arg1: memref<1xi32, #tpu.memory_space<smem>>) -> (i32, i32, i32) {
    %c0_i32 = arith.constant 0 : i32
    %c0_i32_0 = arith.constant 0 : i32
    %c0_i32_1 = arith.constant 0 : i32
    return %arg0, %c0_i32, %c0_i32_0 : i32, i32, i32
  }
  func.func @transform_3(%arg0: i32, %arg1: memref<1xi32, #tpu.memory_space<smem>>) -> (i32, i32) {
    %c0_i32 = arith.constant 0 : i32
    %c0_i32_0 = arith.constant 0 : i32
    return %arg0, %c0_i32 : i32, i32
  }
  func.func @transform_4(%arg0: i32, %arg1: memref<1xi32, #tpu.memory_space<smem>>) -> (i32, i32) {
    %c0_i32 = arith.constant 0 : i32
    %c0_i32_0 = arith.constant 0 : i32
    return %arg0, %c0_i32 : i32, i32
  }
  func.func @transform_5(%arg0: i32, %arg1: memref<1xi32, #tpu.memory_space<smem>>) -> (i32, i32) {
    %c0_i32 = arith.constant 0 : i32
    %c0_i32_0 = arith.constant 0 : i32
    return %arg0, %c0_i32 : i32, i32
  }
}

</mosaic_0001>

<llo_original>
// kernel: tpu_custom_call.1
$region0: #{tpu_custom_call.1}
  #allocation0 [shape = 'u32[]', space=smem, size = 0x4, offset = 0x4, fixed_abs, tag = 'smem constant byte address 0x4 - core index']
  #allocation1 [shape = 'u32[144,128]{1,0:T(1,128)}', space=vmem, size = 0x12000, scoped, tag = 'internal scratch']
  #allocation2 [shape = 'f32[128,128]{1,0:T(8,128)}', space=vmem, size = 0x10000, scoped, tag = 'scratch operand']
  #allocation3 [shape = 'f32[8,128]{1,0:T(8,128)}', space=vmem, size = 0x1000, scoped, tag = 'scratch operand']
  #allocation4 [shape = 's32[1]{0}', space=sflag, size = 0x4, scoped, tag = 'scoped memory for tpu_custom_call.1']
  #allocation5 [shape = 's32[1]{0:T(128)S(6)}', space=smem, size = 0x200, scoped, tag = 'prefetched SMEM operand 0']
  %s0 = inlined_call_operand.<no memory space> [shape: s32[1], index: 0, kind: input, shape index: {}]
  %s1 = inlined_call_operand.hbm [shape: f32[8,16,128], index: 1, kind: input, shape index: {}]
  %s2 = inlined_call_operand.vmem [shape: s32[8,128], index: 2, kind: input, shape index: {}]
  %s3 = inlined_call_operand.vmem [shape: s32[8,1,128], index: 3, kind: input, shape index: {}]
  %s4 = inlined_call_operand.vmem [shape: s32[8,1], index: 4, kind: input, shape index: {}]
  %s5 = inlined_call_operand.vmem [shape: s32[8,1], index: 5, kind: input, shape index: {}]
  %s6 = inlined_call_operand.vmem [shape: f32[8,1], index: 6, kind: output, shape index: {}]
  %s7 = sld [smem:[#allocation0]]
  $region41: #{tpu_custom_call.1} parent=0
    _
  %s9 = ssub.s32 1, %s7
  %s10 = scalar_select 0, %s9, %s7
  %11 = sst [smem:[#allocation5]] %s0
  $region1: #{tpu_custom_call.1} parent=0
    #allocation6 [shape = 'u8[65536]{0}', space=vmem, size = 0x10000, scoped, tag = 'input window, operand 1, single buffered']
    #allocation7 [shape = 's32[1]{0}', space=sflag, size = 0x4, scoped, tag = 'scoped memory for tpu_custom_call.1']
    %12 = vsyncpa [#allocation7], 0
    // Predicated region
    $region2: #{tpu_custom_call.1} parent=1 // pred_check
      _
    $region3: #{tpu_custom_call.1} parent=1 // pred_check_branch
      %14 = sbr.rel (0) target = $region5
    $region4: #{tpu_custom_call.1} parent=1 // pred_region
      %s16 = ssub.s32 2048, 2048
      %17 = vsyncadd [#allocation7], %s16
      %s18 = sshll.u32 [#allocation6], 4
      %s19 = int_to_ptr.vmem [resolvable:$true] %s18
      %24 = dma.hbm_to_vmem [thread:$0]  %s1, 2048, %s19, [#allocation7], 128, 128, 8
    $region5: #{tpu_custom_call.1} parent=1 // pred_fallthru
      _
    // Predicated region
    $region6: #{tpu_custom_call.1} parent=1 // pred_check
      _
    $region7: #{tpu_custom_call.1} parent=1 // pred_check_branch
      %26 = sbr.rel (0) target = $region9
    $region8: #{tpu_custom_call.1} parent=1 // pred_region
      _
    $region9: #{tpu_custom_call.1} parent=1 // pred_fallthru
      _
    // Predicated region
    $region10: #{tpu_custom_call.1} parent=1 // pred_check
      _
    $region11: #{tpu_custom_call.1} parent=1 // pred_check_branch
      %28 = sbr.rel (0) target = $region13
    $region12: #{tpu_custom_call.1} parent=1 // pred_region
      _
    $region13: #{tpu_custom_call.1} parent=1 // pred_fallthru
      _
    // Predicated region
    $region14: #{tpu_custom_call.1} parent=1 // pred_check
      _
    $region15: #{tpu_custom_call.1} parent=1 // pred_check_branch
      %30 = sbr.rel (0) target = $region17
    $region16: #{tpu_custom_call.1} parent=1 // pred_region
      _
    $region17: #{tpu_custom_call.1} parent=1 // pred_fallthru
      _
    // Predicated region
    $region18: #{tpu_custom_call.1} parent=1 // pred_check
      _
    $region19: #{tpu_custom_call.1} parent=1 // pred_check_branch
      %32 = sbr.rel (0) target = $region21
    $region20: #{tpu_custom_call.1} parent=1 // pred_region
      _
    $region21: #{tpu_custom_call.1} parent=1 // pred_fallthru
      _
    // Predicated region
    $region22: #{tpu_custom_call.1} parent=1 // pred_check
      _
    $region23: #{tpu_custom_call.1} parent=1 // pred_check_branch
      %34 = sbr.rel (0) target = $region25
    $region24: #{tpu_custom_call.1} parent=1 // pred_region
      %35 = dma.done [#allocation7], 2048
    $region25: #{tpu_custom_call.1} parent=1 // pred_fallthru
      _
    %v37 = vld [vmem:[#allocation6] sm:$0xff]
    %v38 = vld [vmem:[#allocation6 + $0x8] sm:$0xff]
    %v39 = vld [vmem:[#allocation6 + $0x10] sm:$0xff]
    %v40 = vld [vmem:[#allocation6 + $0x18] sm:$0xff]
    %v41 = vld [vmem:[#allocation6 + $0x20] sm:$0xff]
    %v42 = vld [vmem:[#allocation6 + $0x28] sm:$0xff]
    %v43 = vld [vmem:[#allocation6 + $0x30] sm:$0xff]
    %v44 = vld [vmem:[#allocation6 + $0x38] sm:$0xff]
    %v45 = vld [vmem:[#allocation6 + $0x40] sm:$0xff]
    %v46 = vld [vmem:[#allocation6 + $0x48] sm:$0xff]
    %v47 = vld [vmem:[#allocation6 + $0x50] sm:$0xff]
    %v48 = vld [vmem:[#allocation6 + $0x58] sm:$0xff]
    %v49 = vld [vmem:[#allocation6 + $0x60] sm:$0xff]
    %v50 = vld [vmem:[#allocation6 + $0x68] sm:$0xff]
    %v51 = vld [vmem:[#allocation6 + $0x70] sm:$0xff]
    %v52 = vld [vmem:[#allocation6 + $0x78] sm:$0xff]
    %53 = vmax.xlane.f32.xlu0 %v37
    %v54 = vpop.xlane.xlu0 %53
    %55 = vmax.xlane.f32.xlu0 %v38
    %v56 = vpop.xlane.xlu0 %55
    %57 = vmax.xlane.f32.xlu0 %v39
    %v58 = vpop.xlane.xlu0 %57
    %59 = vmax.xlane.f32.xlu0 %v40
    %v60 = vpop.xlane.xlu0 %59
    %61 = vmax.xlane.f32.xlu0 %v41
    %v62 = vpop.xlane.xlu0 %61
    %63 = vmax.xlane.f32.xlu0 %v42
    %v64 = vpop.xlane.xlu0 %63
    %65 = vmax.xlane.f32.xlu0 %v43
    %v66 = vpop.xlane.xlu0 %65
    %67 = vmax.xlane.f32.xlu0 %v44
    %v68 = vpop.xlane.xlu0 %67
    %69 = vmax.xlane.f32.xlu0 %v45
    %v70 = vpop.xlane.xlu0 %69
    %71 = vmax.xlane.f32.xlu0 %v46
    %v72 = vpop.xlane.xlu0 %71
    %73 = vmax.xlane.f32.xlu0 %v47
    %v74 = vpop.xlane.xlu0 %73
    %75 = vmax.xlane.f32.xlu0 %v48
    %v76 = vpop.xlane.xlu0 %75
    %77 = vmax.xlane.f32.xlu0 %v49
    %v78 = vpop.xlane.xlu0 %77
    %79 = vmax.xlane.f32.xlu0 %v50
    %v80 = vpop.xlane.xlu0 %79
    %81 = vmax.xlane.f32.xlu0 %v51
    %v82 = vpop.xlane.xlu0 %81
    %83 = vmax.xlane.f32.xlu0 %v52
    %v84 = vpop.xlane.xlu0 %83
    %v85 = vsub.f32 %v37, %v54
    %v86 = vsub.f32 %v38, %v56
    %v87 = vsub.f32 %v39, %v58
    %v88 = vsub.f32 %v40, %v60
    %v89 = vsub.f32 %v41, %v62
    %v90 = vsub.f32 %v42, %v64
    %v91 = vsub.f32 %v43, %v66
    %v92 = vsub.f32 %v44, %v68
    %v93 = vsub.f32 %v45, %v70
    %v94 = vsub.f32 %v46, %v72
    %v95 = vsub.f32 %v47, %v74
    %v96 = vsub.f32 %v48, %v76
    %v97 = vsub.f32 %v49, %v78
    %v98 = vsub.f32 %v50, %v80
    %v99 = vsub.f32 %v51, %v82
    %v100 = vsub.f32 %v52, %v84
    %v101 = vmul.f32 %v85, 1.442695
    %v102 = vpow.pop %v101
    %v103 = vmul.f32 %v86, 1.442695
    %v104 = vpow.pop %v103
    %v105 = vmul.f32 %v87, 1.442695
    %v106 = vpow.pop %v105
    %v107 = vmul.f32 %v88, 1.442695
    %v108 = vpow.pop %v107
    %v109 = vmul.f32 %v89, 1.442695
    %v110 = vpow.pop %v109
    %v111 = vmul.f32 %v90, 1.442695
    %v112 = vpow.pop %v111
    %v113 = vmul.f32 %v91, 1.442695
    %v114 = vpow.pop %v113
    %v115 = vmul.f32 %v92, 1.442695
    %v116 = vpow.pop %v115
    %v117 = vmul.f32 %v93, 1.442695
    %v118 = vpow.pop %v117
    %v119 = vmul.f32 %v94, 1.442695
    %v120 = vpow.pop %v119
    %v121 = vmul.f32 %v95, 1.442695
    %v122 = vpow.pop %v121
    %v123 = vmul.f32 %v96, 1.442695
    %v124 = vpow.pop %v123
    %v125 = vmul.f32 %v97, 1.442695
    %v126 = vpow.pop %v125
    %v127 = vmul.f32 %v98, 1.442695
    %v128 = vpow.pop %v127
    %v129 = vmul.f32 %v99, 1.442695
    %v130 = vpow.pop %v129
    %v131 = vmul.f32 %v100, 1.442695
    %v132 = vpow.pop %v131
    %133 = vadd.xlane.f32.xlu0 %v102
    %v134 = vpop.xlane.xlu0 %133
    %135 = vadd.xlane.f32.xlu0 %v104
    %v136 = vpop.xlane.xlu0 %135
    %137 = vadd.xlane.f32.xlu0 %v106
    %v138 = vpop.xlane.xlu0 %137
    %139 = vadd.xlane.f32.xlu0 %v108
    %v140 = vpop.xlane.xlu0 %139
    %141 = vadd.xlane.f32.xlu0 %v110
    %v142 = vpop.xlane.xlu0 %141
    %143 = vadd.xlane.f32.xlu0 %v112
    %v144 = vpop.xlane.xlu0 %143
    %145 = vadd.xlane.f32.xlu0 %v114
    %v146 = vpop.xlane.xlu0 %145
    %147 = vadd.xlane.f32.xlu0 %v116
    %v148 = vpop.xlane.xlu0 %147
    %149 = vadd.xlane.f32.xlu0 %v118
    %v150 = vpop.xlane.xlu0 %149
    %151 = vadd.xlane.f32.xlu0 %v120
    %v152 = vpop.xlane.xlu0 %151
    %153 = vadd.xlane.f32.xlu0 %v122
    %v154 = vpop.xlane.xlu0 %153
    %155 = vadd.xlane.f32.xlu0 %v124
    %v156 = vpop.xlane.xlu0 %155
    %157 = vadd.xlane.f32.xlu0 %v126
    %v158 = vpop.xlane.xlu0 %157
    %159 = vadd.xlane.f32.xlu0 %v128
    %v160 = vpop.xlane.xlu0 %159
    %161 = vadd.xlane.f32.xlu0 %v130
    %v162 = vpop.xlane.xlu0 %161
    %163 = vadd.xlane.f32.xlu0 %v132
    %v164 = vpop.xlane.xlu0 %163
    %v165 = vlog2.pop %v134
    %v166 = vmul.f32 %v165, 0.6931472
    %v167 = vlog2.pop %v136
    %v168 = vmul.f32 %v167, 0.6931472
    %v169 = vlog2.pop %v138
    %v170 = vmul.f32 %v169, 0.6931472
    %v171 = vlog2.pop %v140
    %v172 = vmul.f32 %v171, 0.6931472
    %v173 = vlog2.pop %v142
    %v174 = vmul.f32 %v173, 0.6931472
    %v175 = vlog2.pop %v144
    %v176 = vmul.f32 %v175, 0.6931472
    %v177 = vlog2.pop %v146
    %v178 = vmul.f32 %v177, 0.6931472
    %v179 = vlog2.pop %v148
    %v180 = vmul.f32 %v179, 0.6931472
    %v181 = vlog2.pop %v150
    %v182 = vmul.f32 %v181, 0.6931472
    %v183 = vlog2.pop %v152
    %v184 = vmul.f32 %v183, 0.6931472
    %v185 = vlog2.pop %v154
    %v186 = vmul.f32 %v185, 0.6931472
    %v187 = vlog2.pop %v156
    %v188 = vmul.f32 %v187, 0.6931472
    %v189 = vlog2.pop %v158
    %v190 = vmul.f32 %v189, 0.6931472
    %v191 = vlog2.pop %v160
    %v192 = vmul.f32 %v191, 0.6931472
    %v193 = vlog2.pop %v162
    %v194 = vmul.f32 %v193, 0.6931472
    %v195 = vlog2.pop %v164
    %v196 = vmul.f32 %v195, 0.6931472
    %v197 = vadd.f32 %v54, %v166
    %v198 = vadd.f32 %v56, %v168
    %v199 = vadd.f32 %v58, %v170
    %v200 = vadd.f32 %v60, %v172
    %v201 = vadd.f32 %v62, %v174
    %v202 = vadd.f32 %v64, %v176
    %v203 = vadd.f32 %v66, %v178
    %v204 = vadd.f32 %v68, %v180
    %v205 = vadd.f32 %v70, %v182
    %v206 = vadd.f32 %v72, %v184
    %v207 = vadd.f32 %v74, %v186
    %v208 = vadd.f32 %v76, %v188
    %v209 = vadd.f32 %v78, %v190
    %v210 = vadd.f32 %v80, %v192
    %v211 = vadd.f32 %v82, %v194
    %v212 = vadd.f32 %v84, %v196
    %v213 = vlaneseq
    %v214 = vshrl.u32 %v213, 7
    %v215 = vadd.s32 %v214, 8
    %v216 = vadd.s32 %v214, 16
    %v217 = vadd.s32 %v214, 24
    %v218 = vadd.s32 %v214, 32
    %v219 = vadd.s32 %v214, 40
    %v220 = vadd.s32 %v214, 48
    %v221 = vadd.s32 %v214, 56
    %v222 = vadd.s32 %v214, 64
    %v223 = vadd.s32 %v214, 72
    %v224 = vadd.s32 %v214, 80
    %v225 = vadd.s32 %v214, 88
    %v226 = vadd.s32 %v214, 96
    %v227 = vadd.s32 %v214, 104
    %v228 = vadd.s32 %v214, 112
    %v229 = vadd.s32 %v214, 120
    %v230 = vld [vmem:[%s3] sm:$0x1]
    %v231 = vld [vmem:[%s3 + $0x1] sm:$0x1]
    %v232 = vld [vmem:[%s3 + $0x2] sm:$0x1]
    %v233 = vld [vmem:[%s3 + $0x3] sm:$0x1]
    %v234 = vld [vmem:[%s3 + $0x4] sm:$0x1]
    %v235 = vld [vmem:[%s3 + $0x5] sm:$0x1]
    %v236 = vld [vmem:[%s3 + $0x6] sm:$0x1]
    %v237 = vld [vmem:[%s3 + $0x7] sm:$0x1]
    %v238 = vlaneseq
    %v239 = vshrl.u32 %v238, 7
    %v240 = vsub.s32 0, %v239
    %v241 = vrot.slane %v230, %v240
    %v242 = vlaneseq
    %v243 = vshrl.u32 %v242, 7
    %v244 = vsub.s32 0, %v243
    %v245 = vrot.slane %v231, %v244
    %v246 = vlaneseq
    %v247 = vshrl.u32 %v246, 7
    %v248 = vsub.s32 0, %v247
    %v249 = vrot.slane %v232, %v248
    %v250 = vlaneseq
    %v251 = vshrl.u32 %v250, 7
    %v252 = vsub.s32 0, %v251
    %v253 = vrot.slane %v233, %v252
    %v254 = vlaneseq
    %v255 = vshrl.u32 %v254, 7
    %v256 = vsub.s32 0, %v255
    %v257 = vrot.slane %v234, %v256
    %v258 = vlaneseq
    %v259 = vshrl.u32 %v258, 7
    %v260 = vsub.s32 0, %v259
    %v261 = vrot.slane %v235, %v260
    %v262 = vlaneseq
    %v263 = vshrl.u32 %v262, 7
    %v264 = vsub.s32 0, %v263
    %v265 = vrot.slane %v236, %v264
    %v266 = vlaneseq
    %v267 = vshrl.u32 %v266, 7
    %v268 = vsub.s32 0, %v267
    %v269 = vrot.slane %v237, %v268
    %vm270 = vcmp.eq.s32.totalorder %v241, %v214
    %vm271 = vcmp.eq.s32.totalorder %v241, %v215
    %vm272 = vcmp.eq.s32.totalorder %v241, %v216
    %vm273 = vcmp.eq.s32.totalorder %v241, %v217
    %vm274 = vcmp.eq.s32.totalorder %v241, %v218
    %vm275 = vcmp.eq.s32.totalorder %v241, %v219
    %vm276 = vcmp.eq.s32.totalorder %v241, %v220
    %vm277 = vcmp.eq.s32.totalorder %v241, %v221
    %vm278 = vcmp.eq.s32.totalorder %v241, %v222
    %vm279 = vcmp.eq.s32.totalorder %v241, %v223
    %vm280 = vcmp.eq.s32.totalorder %v241, %v224
    %vm281 = vcmp.eq.s32.totalorder %v241, %v225
    %vm282 = vcmp.eq.s32.totalorder %v241, %v226
    %vm283 = vcmp.eq.s32.totalorder %v241, %v227
    %vm284 = vcmp.eq.s32.totalorder %v241, %v228
    %vm285 = vcmp.eq.s32.totalorder %v241, %v229
    %vm286 = vcmp.eq.s32.totalorder %v245, %v214
    %vm287 = vcmp.eq.s32.totalorder %v245, %v215
    %vm288 = vcmp.eq.s32.totalorder %v245, %v216
    %vm289 = vcmp.eq.s32.totalorder %v245, %v217
    %vm290 = vcmp.eq.s32.totalorder %v245, %v218
    %vm291 = vcmp.eq.s32.totalorder %v245, %v219
    %vm292 = vcmp.eq.s32.totalorder %v245, %v220
    %vm293 = vcmp.eq.s32.totalorder %v245, %v221
    %vm294 = vcmp.eq.s32.totalorder %v245, %v222
    %vm295 = vcmp.eq.s32.totalorder %v245, %v223
    %vm296 = vcmp.eq.s32.totalorder %v245, %v224
    %vm297 = vcmp.eq.s32.totalorder %v245, %v225
    %vm298 = vcmp.eq.s32.totalorder %v245, %v226
    %vm299 = vcmp.eq.s32.totalorder %v245, %v227
    %vm300 = vcmp.eq.s32.totalorder %v245, %v228
    %vm301 = vcmp.eq.s32.totalorder %v245, %v229
    %vm302 = vcmp.eq.s32.totalorder %v249, %v214
    %vm303 = vcmp.eq.s32.totalorder %v249, %v215
    %vm304 = vcmp.eq.s32.totalorder %v249, %v216
    %vm305 = vcmp.eq.s32.totalorder %v249, %v217
    %vm306 = vcmp.eq.s32.totalorder %v249, %v218
    %vm307 = vcmp.eq.s32.totalorder %v249, %v219
    %vm308 = vcmp.eq.s32.totalorder %v249, %v220
    %vm309 = vcmp.eq.s32.totalorder %v249, %v221
    %vm310 = vcmp.eq.s32.totalorder %v249, %v222
    %vm311 = vcmp.eq.s32.totalorder %v249, %v223
    %vm312 = vcmp.eq.s32.totalorder %v249, %v224
    %vm313 = vcmp.eq.s32.totalorder %v249, %v225
    %vm314 = vcmp.eq.s32.totalorder %v249, %v226
    %vm315 = vcmp.eq.s32.totalorder %v249, %v227
    %vm316 = vcmp.eq.s32.totalorder %v249, %v228
    %vm317 = vcmp.eq.s32.totalorder %v249, %v229
    %vm318 = vcmp.eq.s32.totalorder %v253, %v214
    %vm319 = vcmp.eq.s32.totalorder %v253, %v215
    %vm320 = vcmp.eq.s32.totalorder %v253, %v216
    %vm321 = vcmp.eq.s32.totalorder %v253, %v217
    %vm322 = vcmp.eq.s32.totalorder %v253, %v218
    %vm323 = vcmp.eq.s32.totalorder %v253, %v219
    %vm324 = vcmp.eq.s32.totalorder %v253, %v220
    %vm325 = vcmp.eq.s32.totalorder %v253, %v221
    %vm326 = vcmp.eq.s32.totalorder %v253, %v222
    %vm327 = vcmp.eq.s32.totalorder %v253, %v223
    %vm328 = vcmp.eq.s32.totalorder %v253, %v224
    %vm329 = vcmp.eq.s32.totalorder %v253, %v225
    %vm330 = vcmp.eq.s32.totalorder %v253, %v226
    %vm331 = vcmp.eq.s32.totalorder %v253, %v227
    %vm332 = vcmp.eq.s32.totalorder %v253, %v228
    %vm333 = vcmp.eq.s32.totalorder %v253, %v229
    %vm334 = vcmp.eq.s32.totalorder %v257, %v214
    %vm335 = vcmp.eq.s32.totalorder %v257, %v215
    %vm336 = vcmp.eq.s32.totalorder %v257, %v216
    %vm337 = vcmp.eq.s32.totalorder %v257, %v217
    %vm338 = vcmp.eq.s32.totalorder %v257, %v218
    %vm339 = vcmp.eq.s32.totalorder %v257, %v219
    %vm340 = vcmp.eq.s32.totalorder %v257, %v220
    %vm341 = vcmp.eq.s32.totalorder %v257, %v221
    %vm342 = vcmp.eq.s32.totalorder %v257, %v222
    %vm343 = vcmp.eq.s32.totalorder %v257, %v223
    %vm344 = vcmp.eq.s32.totalorder %v257, %v224
    %vm345 = vcmp.eq.s32.totalorder %v257, %v225
    %vm346 = vcmp.eq.s32.totalorder %v257, %v226
    %vm347 = vcmp.eq.s32.totalorder %v257, %v227
    %vm348 = vcmp.eq.s32.totalorder %v257, %v228
    %vm349 = vcmp.eq.s32.totalorder %v257, %v229
    %vm350 = vcmp.eq.s32.totalorder %v261, %v214
    %vm351 = vcmp.eq.s32.totalorder %v261, %v215
    %vm352 = vcmp.eq.s32.totalorder %v261, %v216
    %vm353 = vcmp.eq.s32.totalorder %v261, %v217
    %vm354 = vcmp.eq.s32.totalorder %v261, %v218
    %vm355 = vcmp.eq.s32.totalorder %v261, %v219
    %vm356 = vcmp.eq.s32.totalorder %v261, %v220
    %vm357 = vcmp.eq.s32.totalorder %v261, %v221
    %vm358 = vcmp.eq.s32.totalorder %v261, %v222
    %vm359 = vcmp.eq.s32.totalorder %v261, %v223
    %vm360 = vcmp.eq.s32.totalorder %v261, %v224
    %vm361 = vcmp.eq.s32.totalorder %v261, %v225
    %vm362 = vcmp.eq.s32.totalorder %v261, %v226
    %vm363 = vcmp.eq.s32.totalorder %v261, %v227
    %vm364 = vcmp.eq.s32.totalorder %v261, %v228
    %vm365 = vcmp.eq.s32.totalorder %v261, %v229
    %vm366 = vcmp.eq.s32.totalorder %v265, %v214
    %vm367 = vcmp.eq.s32.totalorder %v265, %v215
    %vm368 = vcmp.eq.s32.totalorder %v265, %v216
    %vm369 = vcmp.eq.s32.totalorder %v265, %v217
    %vm370 = vcmp.eq.s32.totalorder %v265, %v218
    %vm371 = vcmp.eq.s32.totalorder %v265, %v219
    %vm372 = vcmp.eq.s32.totalorder %v265, %v220
    %vm373 = vcmp.eq.s32.totalorder %v265, %v221
    %vm374 = vcmp.eq.s32.totalorder %v265, %v222
    %vm375 = vcmp.eq.s32.totalorder %v265, %v223
    %vm376 = vcmp.eq.s32.totalorder %v265, %v224
    %vm377 = vcmp.eq.s32.totalorder %v265, %v225
    %vm378 = vcmp.eq.s32.totalorder %v265, %v226
    %vm379 = vcmp.eq.s32.totalorder %v265, %v227
    %vm380 = vcmp.eq.s32.totalorder %v265, %v228
    %vm381 = vcmp.eq.s32.totalorder %v265, %v229
    %vm382 = vcmp.eq.s32.totalorder %v269, %v214
    %vm383 = vcmp.eq.s32.totalorder %v269, %v215
    %vm384 = vcmp.eq.s32.totalorder %v269, %v216
    %vm385 = vcmp.eq.s32.totalorder %v269, %v217
    %vm386 = vcmp.eq.s32.totalorder %v269, %v218
    %vm387 = vcmp.eq.s32.totalorder %v269, %v219
    %vm388 = vcmp.eq.s32.totalorder %v269, %v220
    %vm389 = vcmp.eq.s32.totalorder %v269, %v221
    %vm390 = vcmp.eq.s32.totalorder %v269, %v222
    %vm391 = vcmp.eq.s32.totalorder %v269, %v223
    %vm392 = vcmp.eq.s32.totalorder %v269, %v224
    %vm393 = vcmp.eq.s32.totalorder %v269, %v225
    %vm394 = vcmp.eq.s32.totalorder %v269, %v226
    %vm395 = vcmp.eq.s32.totalorder %v269, %v227
    %vm396 = vcmp.eq.s32.totalorder %v269, %v228
    %vm397 = vcmp.eq.s32.totalorder %v269, %v229
    %v398 = vsel %vm270, 1, 0
    %v399 = vsel %vm271, 1, 0
    %v400 = vsel %vm272, 1, 0
    %v401 = vsel %vm273, 1, 0
    %v402 = vsel %vm274, 1, 0
    %v403 = vsel %vm275, 1, 0
    %v404 = vsel %vm276, 1, 0
    %v405 = vsel %vm277, 1, 0
    %v406 = vsel %vm278, 1, 0
    %v407 = vsel %vm279, 1, 0
    %v408 = vsel %vm280, 1, 0
    %v409 = vsel %vm281, 1, 0
    %v410 = vsel %vm282, 1, 0
    %v411 = vsel %vm283, 1, 0
    %v412 = vsel %vm284, 1, 0
    %v413 = vsel %vm285, 1, 0
    %v414 = vsel %vm286, 1, 0
    %v415 = vsel %vm287, 1, 0
    %v416 = vsel %vm288, 1, 0
    %v417 = vsel %vm289, 1, 0
    %v418 = vsel %vm290, 1, 0
    %v419 = vsel %vm291, 1, 0
    %v420 = vsel %vm292, 1, 0
    %v421 = vsel %vm293, 1, 0
    %v422 = vsel %vm294, 1, 0
    %v423 = vsel %vm295, 1, 0
    %v424 = vsel %vm296, 1, 0
    %v425 = vsel %vm297, 1, 0
    %v426 = vsel %vm298, 1, 0
    %v427 = vsel %vm299, 1, 0
    %v428 = vsel %vm300, 1, 0
    %v429 = vsel %vm301, 1, 0
    %v430 = vsel %vm302, 1, 0
    %v431 = vsel %vm303, 1, 0
    %v432 = vsel %vm304, 1, 0
    %v433 = vsel %vm305, 1, 0
    %v434 = vsel %vm306, 1, 0
    %v435 = vsel %vm307, 1, 0
    %v436 = vsel %vm308, 1, 0
    %v437 = vsel %vm309, 1, 0
    %v438 = vsel %vm310, 1, 0
    %v439 = vsel %vm311, 1, 0
    %v440 = vsel %vm312, 1, 0
    %v441 = vsel %vm313, 1, 0
    %v442 = vsel %vm314, 1, 0
    %v443 = vsel %vm315, 1, 0
    %v444 = vsel %vm316, 1, 0
    %v445 = vsel %vm317, 1, 0
    %v446 = vsel %vm318, 1, 0
    %v447 = vsel %vm319, 1, 0
    %v448 = vsel %vm320, 1, 0
    %v449 = vsel %vm321, 1, 0
    %v450 = vsel %vm322, 1, 0
    %v451 = vsel %vm323, 1, 0
    %v452 = vsel %vm324, 1, 0
    %v453 = vsel %vm325, 1, 0
    %v454 = vsel %vm326, 1, 0
    %v455 = vsel %vm327, 1, 0
    %v456 = vsel %vm328, 1, 0
    %v457 = vsel %vm329, 1, 0
    %v458 = vsel %vm330, 1, 0
    %v459 = vsel %vm331, 1, 0
    %v460 = vsel %vm332, 1, 0
    %v461 = vsel %vm333, 1, 0
    %v462 = vsel %vm334, 1, 0
    %v463 = vsel %vm335, 1, 0
    %v464 = vsel %vm336, 1, 0
    %v465 = vsel %vm337, 1, 0
    %v466 = vsel %vm338, 1, 0
    %v467 = vsel %vm339, 1, 0
    %v468 = vsel %vm340, 1, 0
    %v469 = vsel %vm341, 1, 0
    %v470 = vsel %vm342, 1, 0
    %v471 = vsel %vm343, 1, 0
    %v472 = vsel %vm344, 1, 0
    %v473 = vsel %vm345, 1, 0
    %v474 = vsel %vm346, 1, 0
    %v475 = vsel %vm347, 1, 0
    %v476 = vsel %vm348, 1, 0
    %v477 = vsel %vm349, 1, 0
    %v478 = vsel %vm350, 1, 0
    %v479 = vsel %vm351, 1, 0
    %v480 = vsel %vm352, 1, 0
    %v481 = vsel %vm353, 1, 0
    %v482 = vsel %vm354, 1, 0
    %v483 = vsel %vm355, 1, 0
    %v484 = vsel %vm356, 1, 0
    %v485 = vsel %vm357, 1, 0
    %v486 = vsel %vm358, 1, 0
    %v487 = vsel %vm359, 1, 0
    %v488 = vsel %vm360, 1, 0
    %v489 = vsel %vm361, 1, 0
    %v490 = vsel %vm362, 1, 0
    %v491 = vsel %vm363, 1, 0
    %v492 = vsel %vm364, 1, 0
    %v493 = vsel %vm365, 1, 0
    %v494 = vsel %vm366, 1, 0
    %v495 = vsel %vm367, 1, 0
    %v496 = vsel %vm368, 1, 0
    %v497 = vsel %vm369, 1, 0
    %v498 = vsel %vm370, 1, 0
    %v499 = vsel %vm371, 1, 0
    %v500 = vsel %vm372, 1, 0
    %v501 = vsel %vm373, 1, 0
    %v502 = vsel %vm374, 1, 0
    %v503 = vsel %vm375, 1, 0
    %v504 = vsel %vm376, 1, 0
    %v505 = vsel %vm377, 1, 0
    %v506 = vsel %vm378, 1, 0
    %v507 = vsel %vm379, 1, 0
    %v508 = vsel %vm380, 1, 0
    %v509 = vsel %vm381, 1, 0
    %v510 = vsel %vm382, 1, 0
    %v511 = vsel %vm383, 1, 0
    %v512 = vsel %vm384, 1, 0
    %v513 = vsel %vm385, 1, 0
    %v514 = vsel %vm386, 1, 0
    %v515 = vsel %vm387, 1, 0
    %v516 = vsel %vm388, 1, 0
    %v517 = vsel %vm389, 1, 0
    %v518 = vsel %vm390, 1, 0
    %v519 = vsel %vm391, 1, 0
    %v520 = vsel %vm392, 1, 0
    %v521 = vsel %vm393, 1, 0
    %v522 = vsel %vm394, 1, 0
    %v523 = vsel %vm395, 1, 0
    %v524 = vsel %vm396, 1, 0
    %v525 = vsel %vm397, 1, 0
    %v526 = vcvt.s32.f32 %v398
    %v527 = vcvt.s32.f32 %v399
    %v528 = vcvt.s32.f32 %v400
    %v529 = vcvt.s32.f32 %v401
    %v530 = vcvt.s32.f32 %v402
    %v531 = vcvt.s32.f32 %v403
    %v532 = vcvt.s32.f32 %v404
    %v533 = vcvt.s32.f32 %v405
    %v534 = vcvt.s32.f32 %v406
    %v535 = vcvt.s32.f32 %v407
    %v536 = vcvt.s32.f32 %v408
    %v537 = vcvt.s32.f32 %v409
    %v538 = vcvt.s32.f32 %v410
    %v539 = vcvt.s32.f32 %v411
    %v540 = vcvt.s32.f32 %v412
    %v541 = vcvt.s32.f32 %v413
    %v542 = vcvt.s32.f32 %v414
    %v543 = vcvt.s32.f32 %v415
    %v544 = vcvt.s32.f32 %v416
    %v545 = vcvt.s32.f32 %v417
    %v546 = vcvt.s32.f32 %v418
    %v547 = vcvt.s32.f32 %v419
    %v548 = vcvt.s32.f32 %v420
    %v549 = vcvt.s32.f32 %v421
    %v550 = vcvt.s32.f32 %v422
    %v551 = vcvt.s32.f32 %v423
    %v552 = vcvt.s32.f32 %v424
    %v553 = vcvt.s32.f32 %v425
    %v554 = vcvt.s32.f32 %v426
    %v555 = vcvt.s32.f32 %v427
    %v556 = vcvt.s32.f32 %v428
    %v557 = vcvt.s32.f32 %v429
    %v558 = vcvt.s32.f32 %v430
    %v559 = vcvt.s32.f32 %v431
    %v560 = vcvt.s32.f32 %v432
    %v561 = vcvt.s32.f32 %v433
    %v562 = vcvt.s32.f32 %v434
    %v563 = vcvt.s32.f32 %v435
    %v564 = vcvt.s32.f32 %v436
    %v565 = vcvt.s32.f32 %v437
    %v566 = vcvt.s32.f32 %v438
    %v567 = vcvt.s32.f32 %v439
    %v568 = vcvt.s32.f32 %v440
    %v569 = vcvt.s32.f32 %v441
    %v570 = vcvt.s32.f32 %v442
    %v571 = vcvt.s32.f32 %v443
    %v572 = vcvt.s32.f32 %v444
    %v573 = vcvt.s32.f32 %v445
    %v574 = vcvt.s32.f32 %v446
    %v575 = vcvt.s32.f32 %v447
    %v576 = vcvt.s32.f32 %v448
    %v577 = vcvt.s32.f32 %v449
    %v578 = vcvt.s32.f32 %v450
    %v579 = vcvt.s32.f32 %v451
    %v580 = vcvt.s32.f32 %v452
    %v581 = vcvt.s32.f32 %v453
    %v582 = vcvt.s32.f32 %v454
    %v583 = vcvt.s32.f32 %v455
    %v584 = vcvt.s32.f32 %v456
    %v585 = vcvt.s32.f32 %v457
    %v586 = vcvt.s32.f32 %v458
    %v587 = vcvt.s32.f32 %v459
    %v588 = vcvt.s32.f32 %v460
    %v589 = vcvt.s32.f32 %v461
    %v590 = vcvt.s32.f32 %v462
    %v591 = vcvt.s32.f32 %v463
    %v592 = vcvt.s32.f32 %v464
    %v593 = vcvt.s32.f32 %v465
    %v594 = vcvt.s32.f32 %v466
    %v595 = vcvt.s32.f32 %v467
    %v596 = vcvt.s32.f32 %v468
    %v597 = vcvt.s32.f32 %v469
    %v598 = vcvt.s32.f32 %v470
    %v599 = vcvt.s32.f32 %v471
    %v600 = vcvt.s32.f32 %v472
    %v601 = vcvt.s32.f32 %v473
    %v602 = vcvt.s32.f32 %v474
    %v603 = vcvt.s32.f32 %v475
    %v604 = vcvt.s32.f32 %v476
    %v605 = vcvt.s32.f32 %v477
    %v606 = vcvt.s32.f32 %v478
    %v607 = vcvt.s32.f32 %v479
    %v608 = vcvt.s32.f32 %v480
    %v609 = vcvt.s32.f32 %v481
    %v610 = vcvt.s32.f32 %v482
    %v611 = vcvt.s32.f32 %v483
    %v612 = vcvt.s32.f32 %v484
    %v613 = vcvt.s32.f32 %v485
    %v614 = vcvt.s32.f32 %v486
    %v615 = vcvt.s32.f32 %v487
    %v616 = vcvt.s32.f32 %v488
    %v617 = vcvt.s32.f32 %v489
    %v618 = vcvt.s32.f32 %v490
    %v619 = vcvt.s32.f32 %v491
    %v620 = vcvt.s32.f32 %v492
    %v621 = vcvt.s32.f32 %v493
    %v622 = vcvt.s32.f32 %v494
    %v623 = vcvt.s32.f32 %v495
    %v624 = vcvt.s32.f32 %v496
    %v625 = vcvt.s32.f32 %v497
    %v626 = vcvt.s32.f32 %v498
    %v627 = vcvt.s32.f32 %v499
    %v628 = vcvt.s32.f32 %v500
    %v629 = vcvt.s32.f32 %v501
    %v630 = vcvt.s32.f32 %v502
    %v631 = vcvt.s32.f32 %v503
    %v632 = vcvt.s32.f32 %v504
    %v633 = vcvt.s32.f32 %v505
    %v634 = vcvt.s32.f32 %v506
    %v635 = vcvt.s32.f32 %v507
    %v636 = vcvt.s32.f32 %v508
    %v637 = vcvt.s32.f32 %v509
    %v638 = vcvt.s32.f32 %v510
    %v639 = vcvt.s32.f32 %v511
    %v640 = vcvt.s32.f32 %v512
    %v641 = vcvt.s32.f32 %v513
    %v642 = vcvt.s32.f32 %v514
    %v643 = vcvt.s32.f32 %v515
    %v644 = vcvt.s32.f32 %v516
    %v645 = vcvt.s32.f32 %v517
    %v646 = vcvt.s32.f32 %v518
    %v647 = vcvt.s32.f32 %v519
    %v648 = vcvt.s32.f32 %v520
    %v649 = vcvt.s32.f32 %v521
    %v650 = vcvt.s32.f32 %v522
    %v651 = vcvt.s32.f32 %v523
    %v652 = vcvt.s32.f32 %v524
    %v653 = vcvt.s32.f32 %v525
    %v654 = vpack.c.bf16 %v527, %v526
    %v655 = vpack.c.bf16 %v529, %v528
    %v656 = vpack.c.bf16 %v531, %v530
    %v657 = vpack.c.bf16 %v533, %v532
    %v658 = vpack.c.bf16 %v535, %v534
    %v659 = vpack.c.bf16 %v537, %v536
    %v660 = vpack.c.bf16 %v539, %v538
    %v661 = vpack.c.bf16 %v541, %v540
    %v662 = vpack.c.bf16 %v543, %v542
    %v663 = vpack.c.bf16 %v545, %v544
    %v664 = vpack.c.bf16 %v547, %v546
    %v665 = vpack.c.bf16 %v549, %v548
    %v666 = vpack.c.bf16 %v551, %v550
    %v667 = vpack.c.bf16 %v553, %v552
    %v668 = vpack.c.bf16 %v555, %v554
    %v669 = vpack.c.bf16 %v557, %v556
    %v670 = vpack.c.bf16 %v559, %v558
    %v671 = vpack.c.bf16 %v561, %v560
    %v672 = vpack.c.bf16 %v563, %v562
    %v673 = vpack.c.bf16 %v565, %v564
    %v674 = vpack.c.bf16 %v567, %v566
    %v675 = vpack.c.bf16 %v569, %v568
    %v676 = vpack.c.bf16 %v571, %v570
    %v677 = vpack.c.bf16 %v573, %v572
    %v678 = vpack.c.bf16 %v575, %v574
    %v679 = vpack.c.bf16 %v577, %v576
    %v680 = vpack.c.bf16 %v579, %v578
    %v681 = vpack.c.bf16 %v581, %v580
    %v682 = vpack.c.bf16 %v583, %v582
    %v683 = vpack.c.bf16 %v585, %v584
    %v684 = vpack.c.bf16 %v587, %v586
    %v685 = vpack.c.bf16 %v589, %v588
    %v686 = vpack.c.bf16 %v591, %v590
    %v687 = vpack.c.bf16 %v593, %v592
    %v688 = vpack.c.bf16 %v595, %v594
    %v689 = vpack.c.bf16 %v597, %v596
    %v690 = vpack.c.bf16 %v599, %v598
    %v691 = vpack.c.bf16 %v601, %v600
    %v692 = vpack.c.bf16 %v603, %v602
    %v693 = vpack.c.bf16 %v605, %v604
    %v694 = vpack.c.bf16 %v607, %v606
    %v695 = vpack.c.bf16 %v609, %v608
    %v696 = vpack.c.bf16 %v611, %v610
    %v697 = vpack.c.bf16 %v613, %v612
    %v698 = vpack.c.bf16 %v615, %v614
    %v699 = vpack.c.bf16 %v617, %v616
    %v700 = vpack.c.bf16 %v619, %v618
    %v701 = vpack.c.bf16 %v621, %v620
    %v702 = vpack.c.bf16 %v623, %v622
    %v703 = vpack.c.bf16 %v625, %v624
    %v704 = vpack.c.bf16 %v627, %v626
    %v705 = vpack.c.bf16 %v629, %v628
    %v706 = vpack.c.bf16 %v631, %v630
    %v707 = vpack.c.bf16 %v633, %v632
    %v708 = vpack.c.bf16 %v635, %v634
    %v709 = vpack.c.bf16 %v637, %v636
    %v710 = vpack.c.bf16 %v639, %v638
    %v711 = vpack.c.bf16 %v641, %v640
    %v712 = vpack.c.bf16 %v643, %v642
    %v713 = vpack.c.bf16 %v645, %v644
    %v714 = vpack.c.bf16 %v647, %v646
    %v715 = vpack.c.bf16 %v649, %v648
    %v716 = vpack.c.bf16 %v651, %v650
    %v717 = vpack.c.bf16 %v653, %v652
    %v718 = vpack.c.bf16 %v38, %v37
    %v719 = vpack.c.bf16 %v40, %v39
    %v720 = vpack.c.bf16 %v42, %v41
    %v721 = vpack.c.bf16 %v44, %v43
    %v722 = vpack.c.bf16 %v46, %v45
    %v723 = vpack.c.bf16 %v48, %v47
    %v724 = vpack.c.bf16 %v50, %v49
    %v725 = vpack.c.bf16 %v52, %v51
    %726 = vmatprep.subr.bf16.mxu0 0
    %727 = vmatpush1.bf16.msra.mxu0 %v654
    %728 = vmatprep.subr.bf16.mxu0 0
    %729 = vmatpush1.bf16.msra.mxu0 %v655
    %730 = vmatprep.subr.bf16.mxu0 0
    %731 = vmatpush1.bf16.msra.mxu0 %v656
    %732 = vmatprep.subr.bf16.mxu0 0
    %733 = vmatpush1.bf16.msra.mxu0 %v657
    %734 = vmatprep.subr.bf16.mxu0 0
    %735 = vmatpush1.bf16.msra.mxu0 %v658
    %736 = vmatprep.subr.bf16.mxu0 0
    %737 = vmatpush1.bf16.msra.mxu0 %v659
    %738 = vmatprep.subr.bf16.mxu0 0
    %739 = vmatpush1.bf16.msra.mxu0 %v660
    %740 = vmatprep.subr.bf16.mxu0 0
    %741 = vmatpush1.bf16.msra.mxu0 %v661
    %742 = vmatprep.subr.bf16.mxu0 0
    %743 = vmatpush1.bf16.msra.mxu0 0
    %744 = vmatprep.subr.bf16.mxu0 0
    %745 = vmatpush1.bf16.msra.mxu0 0
    %746 = vmatprep.subr.bf16.mxu0 0
    %747 = vmatpush1.bf16.msra.mxu0 0
    %748 = vmatprep.subr.bf16.mxu0 0
    %749 = vmatpush1.bf16.msra.mxu0 0
    %750 = vmatprep.subr.bf16.mxu0 0
    %751 = vmatpush1.bf16.msra.mxu0 0
    %752 = vmatprep.subr.bf16.mxu0 0
    %753 = vmatpush1.bf16.msra.mxu0 0
    %754 = vmatprep.subr.bf16.mxu0 0
    %755 = vmatpush1.bf16.msra.mxu0 0
    %756 = vmatprep.subr.bf16.mxu0 0
    %757 = vmatpush1.bf16.msra.mxu0 0
    %758 = vmatprep.mubr.bf16.mxu0 0
    %759 = vmatmul.mubr.bf16.gmra.mrb[0].mxu0 %v718
    %v760 = vpop.f32.mrb[0].mxu0
    %v761 = vadd.f32 0.0, %v760
    %v762 = vpop.f32.mrb[0].mxu0
    %v763 = vpop.f32.mrb[0].mxu0
    %v764 = vadd.f32 0.0, %v763
    %v765 = vpop.f32.mrb[0].mxu0
    %766 = vdwg.mxu0
    %767 = vmatprep.subr.bf16.mxu0 0
    %768 = vmatpush1.bf16.msra.mxu0 %v662
    %769 = vmatprep.subr.bf16.mxu0 0
    %770 = vmatpush1.bf16.msra.mxu0 %v663
    %771 = vmatprep.subr.bf16.mxu0 0
    %772 = vmatpush1.bf16.msra.mxu0 %v664
    %773 = vmatprep.subr.bf16.mxu0 0
    %774 = vmatpush1.bf16.msra.mxu0 %v665
    %775 = vmatprep.subr.bf16.mxu0 0
    %776 = vmatpush1.bf16.msra.mxu0 %v666
    %777 = vmatprep.subr.bf16.mxu0 0
    %778 = vmatpush1.bf16.msra.mxu0 %v667
    %779 = vmatprep.subr.bf16.mxu0 0
    %780 = vmatpush1.bf16.msra.mxu0 %v668
    %781 = vmatprep.subr.bf16.mxu0 0
    %782 = vmatpush1.bf16.msra.mxu0 %v669
    %783 = vmatprep.subr.bf16.mxu0 0
    %784 = vmatpush1.bf16.msra.mxu0 0
    %785 = vmatprep.subr.bf16.mxu0 0
    %786 = vmatpush1.bf16.msra.mxu0 0
    %787 = vmatprep.subr.bf16.mxu0 0
    %788 = vmatpush1.bf16.msra.mxu0 0
    %789 = vmatprep.subr.bf16.mxu0 0
    %790 = vmatpush1.bf16.msra.mxu0 0
    %791 = vmatprep.subr.bf16.mxu0 0
    %792 = vmatpush1.bf16.msra.mxu0 0
    %793 = vmatprep.subr.bf16.mxu0 0
    %794 = vmatpush1.bf16.msra.mxu0 0
    %795 = vmatprep.subr.bf16.mxu0 0
    %796 = vmatpush1.bf16.msra.mxu0 0
    %797 = vmatprep.subr.bf16.mxu0 0
    %798 = vmatpush1.bf16.msra.mxu0 0
    %799 = vmatprep.mubr.bf16.mxu0 0
    %800 = vmatmul.mubr.bf16.gmra.mrb[0].mxu0 %v719
    %v801 = vpop.f32.mrb[0].mxu0
    %v802 = vadd.f32 0.0, %v801
    %v803 = vpop.f32.mrb[0].mxu0
    %v804 = vpop.f32.mrb[0].mxu0
    %v805 = vadd.f32 0.0, %v804
    %v806 = vpop.f32.mrb[0].mxu0
    %807 = vdwg.mxu0
    %808 = vmatprep.subr.bf16.mxu0 0
    %809 = vmatpush1.bf16.msra.mxu0 %v670
    %810 = vmatprep.subr.bf16.mxu0 0
    %811 = vmatpush1.bf16.msra.mxu0 %v671
    %812 = vmatprep.subr.bf16.mxu0 0
    %813 = vmatpush1.bf16.msra.mxu0 %v672
    %814 = vmatprep.subr.bf16.mxu0 0
    %815 = vmatpush1.bf16.msra.mxu0 %v673
    %816 = vmatprep.subr.bf16.mxu0 0
    %817 = vmatpush1.bf16.msra.mxu0 %v674
    %818 = vmatprep.subr.bf16.mxu0 0
    %819 = vmatpush1.bf16.msra.mxu0 %v675
    %820 = vmatprep.subr.bf16.mxu0 0
    %821 = vmatpush1.bf16.msra.mxu0 %v676
    %822 = vmatprep.subr.bf16.mxu0 0
    %823 = vmatpush1.bf16.msra.mxu0 %v677
    %824 = vmatprep.subr.bf16.mxu0 0
    %825 = vmatpush1.bf16.msra.mxu0 0
    %826 = vmatprep.subr.bf16.mxu0 0
    %827 = vmatpush1.bf16.msra.mxu0 0
    %828 = vmatprep.subr.bf16.mxu0 0
    %829 = vmatpush1.bf16.msra.mxu0 0
    %830 = vmatprep.subr.bf16.mxu0 0
    %831 = vmatpush1.bf16.msra.mxu0 0
    %832 = vmatprep.subr.bf16.mxu0 0
    %833 = vmatpush1.bf16.msra.mxu0 0
    %834 = vmatprep.subr.bf16.mxu0 0
    %835 = vmatpush1.bf16.msra.mxu0 0
    %836 = vmatprep.subr.bf16.mxu0 0
    %837 = vmatpush1.bf16.msra.mxu0 0
    %838 = vmatprep.subr.bf16.mxu0 0
    %839 = vmatpush1.bf16.msra.mxu0 0
    %840 = vmatprep.mubr.bf16.mxu0 0
    %841 = vmatmul.mubr.bf16.gmra.mrb[0].mxu0 %v720
    %v842 = vpop.f32.mrb[0].mxu0
    %v843 = vadd.f32 0.0, %v842
    %v844 = vpop.f32.mrb[0].mxu0
    %v845 = vpop.f32.mrb[0].mxu0
    %v846 = vadd.f32 0.0, %v845
    %v847 = vpop.f32.mrb[0].mxu0
    %848 = vdwg.mxu0
    %849 = vmatprep.subr.bf16.mxu0 0
    %850 = vmatpush1.bf16.msra.mxu0 %v678
    %851 = vmatprep.subr.bf16.mxu0 0
    %852 = vmatpush1.bf16.msra.mxu0 %v679
    %853 = vmatprep.subr.bf16.mxu0 0
    %854 = vmatpush1.bf16.msra.mxu0 %v680
    %855 = vmatprep.subr.bf16.mxu0 0
    %856 = vmatpush1.bf16.msra.mxu0 %v681
    %857 = vmatprep.subr.bf16.mxu0 0
    %858 = vmatpush1.bf16.msra.mxu0 %v682
    %859 = vmatprep.subr.bf16.mxu0 0
    %860 = vmatpush1.bf16.msra.mxu0 %v683
    %861 = vmatprep.subr.bf16.mxu0 0
    %862 = vmatpush1.bf16.msra.mxu0 %v684
    %863 = vmatprep.subr.bf16.mxu0 0
    %864 = vmatpush1.bf16.msra.mxu0 %v685
    %865 = vmatprep.subr.bf16.mxu0 0
    %866 = vmatpush1.bf16.msra.mxu0 0
    %867 = vmatprep.subr.bf16.mxu0 0
    %868 = vmatpush1.bf16.msra.mxu0 0
    %869 = vmatprep.subr.bf16.mxu0 0
    %870 = vmatpush1.bf16.msra.mxu0 0
    %871 = vmatprep.subr.bf16.mxu0 0
    %872 = vmatpush1.bf16.msra.mxu0 0
    %873 = vmatprep.subr.bf16.mxu0 0
    %874 = vmatpush1.bf16.msra.mxu0 0
    %875 = vmatprep.subr.bf16.mxu0 0
    %876 = vmatpush1.bf16.msra.mxu0 0
    %877 = vmatprep.subr.bf16.mxu0 0
    %878 = vmatpush1.bf16.msra.mxu0 0
    %879 = vmatprep.subr.bf16.mxu0 0
    %880 = vmatpush1.bf16.msra.mxu0 0
    %881 = vmatprep.mubr.bf16.mxu0 0
    %882 = vmatmul.mubr.bf16.gmra.mrb[0].mxu0 %v721
    %v883 = vpop.f32.mrb[0].mxu0
    %v884 = vadd.f32 0.0, %v883
    %v885 = vpop.f32.mrb[0].mxu0
    %v886 = vpop.f32.mrb[0].mxu0
    %v887 = vadd.f32 0.0, %v886
    %v888 = vpop.f32.mrb[0].mxu0
    %889 = vdwg.mxu0
    %890 = vmatprep.subr.bf16.mxu0 0
    %891 = vmatpush1.bf16.msra.mxu0 %v686
    %892 = vmatprep.subr.bf16.mxu0 0
    %893 = vmatpush1.bf16.msra.mxu0 %v687
    %894 = vmatprep.subr.bf16.mxu0 0
    %895 = vmatpush1.bf16.msra.mxu0 %v688
    %896 = vmatprep.subr.bf16.mxu0 0
    %897 = vmatpush1.bf16.msra.mxu0 %v689
    %898 = vmatprep.subr.bf16.mxu0 0
    %899 = vmatpush1.bf16.msra.mxu0 %v690
    %900 = vmatprep.subr.bf16.mxu0 0
    %901 = vmatpush1.bf16.msra.mxu0 %v691
    %902 = vmatprep.subr.bf16.mxu0 0
    %903 = vmatpush1.bf16.msra.mxu0 %v692
    %904 = vmatprep.subr.bf16.mxu0 0
    %905 = vmatpush1.bf16.msra.mxu0 %v693
    %906 = vmatprep.subr.bf16.mxu0 0
    %907 = vmatpush1.bf16.msra.mxu0 0
    %908 = vmatprep.subr.bf16.mxu0 0
    %909 = vmatpush1.bf16.msra.mxu0 0
    %910 = vmatprep.subr.bf16.mxu0 0
    %911 = vmatpush1.bf16.msra.mxu0 0
    %912 = vmatprep.subr.bf16.mxu0 0
    %913 = vmatpush1.bf16.msra.mxu0 0
    %914 = vmatprep.subr.bf16.mxu0 0
    %915 = vmatpush1.bf16.msra.mxu0 0
    %916 = vmatprep.subr.bf16.mxu0 0
    %917 = vmatpush1.bf16.msra.mxu0 0
    %918 = vmatprep.subr.bf16.mxu0 0
    %919 = vmatpush1.bf16.msra.mxu0 0
    %920 = vmatprep.subr.bf16.mxu0 0
    %921 = vmatpush1.bf16.msra.mxu0 0
    %922 = vmatprep.mubr.bf16.mxu0 0
    %923 = vmatmul.mubr.bf16.gmra.mrb[0].mxu0 %v722
    %v924 = vpop.f32.mrb[0].mxu0
    %v925 = vadd.f32 0.0, %v924
    %v926 = vpop.f32.mrb[0].mxu0
    %v927 = vpop.f32.mrb[0].mxu0
    %v928 = vadd.f32 0.0, %v927
    %v929 = vpop.f32.mrb[0].mxu0
    %930 = vdwg.mxu0
    %931 = vmatprep.subr.bf16.mxu0 0
    %932 = vmatpush1.bf16.msra.mxu0 %v694
    %933 = vmatprep.subr.bf16.mxu0 0
    %934 = vmatpush1.bf16.msra.mxu0 %v695
    %935 = vmatprep.subr.bf16.mxu0 0
    %936 = vmatpush1.bf16.msra.mxu0 %v696
    %937 = vmatprep.subr.bf16.mxu0 0
    %938 = vmatpush1.bf16.msra.mxu0 %v697
    %939 = vmatprep.subr.bf16.mxu0 0
    %940 = vmatpush1.bf16.msra.mxu0 %v698
    %941 = vmatprep.subr.bf16.mxu0 0
    %942 = vmatpush1.bf16.msra.mxu0 %v699
    %943 = vmatprep.subr.bf16.mxu0 0
    %944 = vmatpush1.bf16.msra.mxu0 %v700
    %945 = vmatprep.subr.bf16.mxu0 0
    %946 = vmatpush1.bf16.msra.mxu0 %v701
    %947 = vmatprep.subr.bf16.mxu0 0
    %948 = vmatpush1.bf16.msra.mxu0 0
    %949 = vmatprep.subr.bf16.mxu0 0
    %950 = vmatpush1.bf16.msra.mxu0 0
    %951 = vmatprep.subr.bf16.mxu0 0
    %952 = vmatpush1.bf16.msra.mxu0 0
    %953 = vmatprep.subr.bf16.mxu0 0
    %954 = vmatpush1.bf16.msra.mxu0 0
    %955 = vmatprep.subr.bf16.mxu0 0
    %956 = vmatpush1.bf16.msra.mxu0 0
    %957 = vmatprep.subr.bf16.mxu0 0
    %958 = vmatpush1.bf16.msra.mxu0 0
    %959 = vmatprep.subr.bf16.mxu0 0
    %960 = vmatpush1.bf16.msra.mxu0 0
    %961 = vmatprep.subr.bf16.mxu0 0
    %962 = vmatpush1.bf16.msra.mxu0 0
    %963 = vmatprep.mubr.bf16.mxu0 0
    %964 = vmatmul.mubr.bf16.gmra.mrb[0].mxu0 %v723
    %v965 = vpop.f32.mrb[0].mxu0
    %v966 = vadd.f32 0.0, %v965
    %v967 = vpop.f32.mrb[0].mxu0
    %v968 = vpop.f32.mrb[0].mxu0
    %v969 = vadd.f32 0.0, %v968
    %v970 = vpop.f32.mrb[0].mxu0
    %971 = vdwg.mxu0
    %972 = vmatprep.subr.bf16.mxu0 0
    %973 = vmatpush1.bf16.msra.mxu0 %v702
    %974 = vmatprep.subr.bf16.mxu0 0
    %975 = vmatpush1.bf16.msra.mxu0 %v703
    %976 = vmatprep.subr.bf16.mxu0 0
    %977 = vmatpush1.bf16.msra.mxu0 %v704
    %978 = vmatprep.subr.bf16.mxu0 0
    %979 = vmatpush1.bf16.msra.mxu0 %v705
    %980 = vmatprep.subr.bf16.mxu0 0
    %981 = vmatpush1.bf16.msra.mxu0 %v706
    %982 = vmatprep.subr.bf16.mxu0 0
    %983 = vmatpush1.bf16.msra.mxu0 %v707
    %984 = vmatprep.subr.bf16.mxu0 0
    %985 = vmatpush1.bf16.msra.mxu0 %v708
    %986 = vmatprep.subr.bf16.mxu0 0
    %987 = vmatpush1.bf16.msra.mxu0 %v709
    %988 = vmatprep.subr.bf16.mxu0 0
    %989 = vmatpush1.bf16.msra.mxu0 0
    %990 = vmatprep.subr.bf16.mxu0 0
    %991 = vmatpush1.bf16.msra.mxu0 0
    %992 = vmatprep.subr.bf16.mxu0 0
    %993 = vmatpush1.bf16.msra.mxu0 0
    %994 = vmatprep.subr.bf16.mxu0 0
    %995 = vmatpush1.bf16.msra.mxu0 0
    %996 = vmatprep.subr.bf16.mxu0 0
    %997 = vmatpush1.bf16.msra.mxu0 0
    %998 = vmatprep.subr.bf16.mxu0 0
    %999 = vmatpush1.bf16.msra.mxu0 0
    %1000 = vmatprep.subr.bf16.mxu0 0
    %1001 = vmatpush1.bf16.msra.mxu0 0
    %1002 = vmatprep.subr.bf16.mxu0 0
    %1003 = vmatpush1.bf16.msra.mxu0 0
    %1004 = vmatprep.mubr.bf16.mxu0 0
    %1005 = vmatmul.mubr.bf16.gmra.mrb[0].mxu0 %v724
    %v1006 = vpop.f32.mrb[0].mxu0
    %v1007 = vadd.f32 0.0, %v1006
    %v1008 = vpop.f32.mrb[0].mxu0
    %v1009 = vpop.f32.mrb[0].mxu0
    %v1010 = vadd.f32 0.0, %v1009
    %v1011 = vpop.f32.mrb[0].mxu0
    %1012 = vdwg.mxu0
    %1013 = vmatprep.subr.bf16.mxu0 0
    %1014 = vmatpush1.bf16.msra.mxu0 %v710
    %1015 = vmatprep.subr.bf16.mxu0 0
    %1016 = vmatpush1.bf16.msra.mxu0 %v711
    %1017 = vmatprep.subr.bf16.mxu0 0
    %1018 = vmatpush1.bf16.msra.mxu0 %v712
    %1019 = vmatprep.subr.bf16.mxu0 0
    %1020 = vmatpush1.bf16.msra.mxu0 %v713
    %1021 = vmatprep.subr.bf16.mxu0 0
    %1022 = vmatpush1.bf16.msra.mxu0 %v714
    %1023 = vmatprep.subr.bf16.mxu0 0
    %1024 = vmatpush1.bf16.msra.mxu0 %v715
    %1025 = vmatprep.subr.bf16.mxu0 0
    %1026 = vmatpush1.bf16.msra.mxu0 %v716
    %1027 = vmatprep.subr.bf16.mxu0 0
    %1028 = vmatpush1.bf16.msra.mxu0 %v717
    %1029 = vmatprep.subr.bf16.mxu0 0
    %1030 = vmatpush1.bf16.msra.mxu0 0
    %1031 = vmatprep.subr.bf16.mxu0 0
    %1032 = vmatpush1.bf16.msra.mxu0 0
    %1033 = vmatprep.subr.bf16.mxu0 0
    %1034 = vmatpush1.bf16.msra.mxu0 0
    %1035 = vmatprep.subr.bf16.mxu0 0
    %1036 = vmatpush1.bf16.msra.mxu0 0
    %1037 = vmatprep.subr.bf16.mxu0 0
    %1038 = vmatpush1.bf16.msra.mxu0 0
    %1039 = vmatprep.subr.bf16.mxu0 0
    %1040 = vmatpush1.bf16.msra.mxu0 0
    %1041 = vmatprep.subr.bf16.mxu0 0
    %1042 = vmatpush1.bf16.msra.mxu0 0
    %1043 = vmatprep.subr.bf16.mxu0 0
    %1044 = vmatpush1.bf16.msra.mxu0 0
    %1045 = vmatprep.mubr.bf16.mxu0 0
    %1046 = vmatmul.mubr.bf16.gmra.mrb[0].mxu0 %v725
    %v1047 = vpop.f32.mrb[0].mxu0
    %v1048 = vadd.f32 0.0, %v1047
    %v1049 = vpop.f32.mrb[0].mxu0
    %v1050 = vpop.f32.mrb[0].mxu0
    %v1051 = vadd.f32 0.0, %v1050
    %v1052 = vpop.f32.mrb[0].mxu0
    %1053 = vdwg.mxu0
    %v1054 = vsub.f32 %v761, %v197
    %v1055 = vsub.f32 %v764, %v198
    %v1056 = vsub.f32 %v802, %v199
    %v1057 = vsub.f32 %v805, %v200
    %v1058 = vsub.f32 %v843, %v201
    %v1059 = vsub.f32 %v846, %v202
    %v1060 = vsub.f32 %v884, %v203
    %v1061 = vsub.f32 %v887, %v204
    %v1062 = vsub.f32 %v925, %v205
    %v1063 = vsub.f32 %v928, %v206
    %v1064 = vsub.f32 %v966, %v207
    %v1065 = vsub.f32 %v969, %v208
    %v1066 = vsub.f32 %v1007, %v209
    %v1067 = vsub.f32 %v1010, %v210
    %v1068 = vsub.f32 %v1048, %v211
    %v1069 = vsub.f32 %v1051, %v212
    %1070 = vst [vmem:[#allocation2] sm:$0xff] %v1054
    %1071 = vst [vmem:[#allocation2 + $0x8] sm:$0xff] %v1055
    %1072 = vst [vmem:[#allocation2 + $0x10] sm:$0xff] %v1056
    %1073 = vst [vmem:[#allocation2 + $0x18] sm:$0xff] %v1057
    %1074 = vst [vmem:[#allocation2 + $0x20] sm:$0xff] %v1058
    %1075 = vst [vmem:[#allocation2 + $0x28] sm:$0xff] %v1059
    %1076 = vst [vmem:[#allocation2 + $0x30] sm:$0xff] %v1060
    %1077 = vst [vmem:[#allocation2 + $0x38] sm:$0xff] %v1061
    %1078 = vst [vmem:[#allocation2 + $0x40] sm:$0xff] %v1062
    %1079 = vst [vmem:[#allocation2 + $0x48] sm:$0xff] %v1063
    %1080 = vst [vmem:[#allocation2 + $0x50] sm:$0xff] %v1064
    %1081 = vst [vmem:[#allocation2 + $0x58] sm:$0xff] %v1065
    %1082 = vst [vmem:[#allocation2 + $0x60] sm:$0xff] %v1066
    %1083 = vst [vmem:[#allocation2 + $0x68] sm:$0xff] %v1067
    %1084 = vst [vmem:[#allocation2 + $0x70] sm:$0xff] %v1068
    %1085 = vst [vmem:[#allocation2 + $0x78] sm:$0xff] %v1069
    %v1086 = vld [vmem:[%s2] sm:$0xff]
    %v1087 = vcvt.s32.f32 %v1086
    %v1088 = vlaneseq
    %v1089 = vand.u32 %v1088, 127
    %vm1090 = vcmp.ge.s32.totalorder %v1089, 1
    %vm1091 = vcmp.ge.s32.totalorder %v1089, 2
    %vm1092 = vcmp.ne.s32.totalorder %v1086, 0
    %vm1093 = vmand %vm1091, %vm1092
    %1094 = vrot.lane.b32.xlu0 %v1087, 2
    %v1095 = vpop.permute.xlu0 %1094
    %vm1096 = vcmp.ne.f32.partialorder %v1087, %v1095
    %vm1097 = vmand %vm1093, %vm1096
    %v1098 = vld [vmem:[%s4] sm:$0xff]
    %v1099 = vld [vmem:[%s5] sm:$0xff]
    %v1100 = vld [vmem:[#allocation2] ss:$16 sm:$0x3]
    %v1101 = vld [vmem:[#allocation2] ss:$16 sm:$0xc]
    %v1102 = vor.u32 %v1100, %v1101
    %v1103 = vld [vmem:[#allocation2] ss:$16 sm:$0x30]
    %v1104 = vor.u32 %v1102, %v1103
    %v1105 = vld [vmem:[#allocation2] ss:$16 sm:$0xc0]
    %v1106 = vor.u32 %v1104, %v1105
    %vm1107 = vcmp.le.s32.totalorder %v1089, 1
    %v1108 = vsel %vm1107, %v1106, -1e+30
    %1109 = vst [vmem:[#allocation3] sm:$0xff] %v1108
    %s1110 = sld [smem:[#allocation5]]
    %p1111 = scmp.lt.s32.totalorder %s1110, 16
    %s1112 = scalar_select %p1111, %s1110, 16
    %s1113 = ssub.s32 %s1112, 1
    // While loop
    $region26: #{tpu_custom_call.1} parent=1 // loop_pre_header
      _
    $region27: #{tpu_custom_call.1} parent=1 // loop_header
      %s1115 = sphi 0, %s1117
      %p1116 = scmp.ge.s32.totalorder %s1115, %s1113
    $region28: #{tpu_custom_call.1} parent=1 // loop_header_branch
      %1119 = sbr.rel (%p1116) target = $region32
    $region29: #{tpu_custom_call.1} parent=1 // loop_body
      %s1120 = sadd.s32 %s1115, 1
      %v1121 = vld [vmem:[#allocation3] sm:$0xff]
      %1122 = vrot.lane.b32.xlu0 %v1121, 1
      %v1123 = vpop.permute.xlu0 %1122
      %v1124 = vsel %vm1090, %v1123, -1e+30
      %1125 = vrot.lane.b32.xlu0 %v1121, 2
      %v1126 = vpop.permute.xlu0 %1125
      %v1127 = vsel %vm1097, %v1126, -1e+30
      %v1128 = vmax.f32 %v1121, %v1124
      %v1129 = vmax.f32 %v1128, %v1127
      %v1130 = vsub.f32 %v1121, %v1129
      %v1131 = vmul.f32 %v1130, 1.442695
      %v1132 = vpow.pop %v1131
      %v1133 = vsub.f32 %v1124, %v1129
      %v1134 = vmul.f32 %v1133, 1.442695
      %v1135 = vpow.pop %v1134
      %v1136 = vadd.f32 %v1132, %v1135
      %v1137 = vsub.f32 %v1127, %v1129
      %v1138 = vmul.f32 %v1137, 1.442695
      %v1139 = vpow.pop %v1138
      %v1140 = vadd.f32 %v1136, %v1139
      %v1141 = vlog2.pop %v1140
      %v1142 = vmul.f32 %v1141, 0.6931472
      %v1143 = vadd.f32 %v1129, %v1142
      %s1144 = scalar_lea.vmem [#allocation2], %s1120
      %v1145 = vld [vmem:[%s1144] ss:$16 sm:$0x3]
      %v1146 = vld [vmem:[%s1144] ss:$16 sm:$0xc]
      %v1147 = vor.u32 %v1145, %v1146
      %v1148 = vld [vmem:[%s1144] ss:$16 sm:$0x30]
      %v1149 = vor.u32 %v1147, %v1148
      %v1150 = vld [vmem:[%s1144] ss:$16 sm:$0xc0]
      %v1151 = vor.u32 %v1149, %v1150
      %v1152 = vstv %s1120
      %vm1153 = vcmp.lt.s32.totalorder %v1152, %v1098
      %v1154 = vadd.f32 %v1143, %v1151
      %v1155 = vsel %vm1153, 1, 0
      %1156 = vset.pattern.permute.xlu0 0
      %1157 = vperm.xlu0 %1156, %v1155
      %v1158 = vpop.permute.xlu0 %1157
      %vm1159 = vcmp.eq.s32.totalorder %v1158, 1
      %v1160 = vsel %vm1159, %v1154, %v1121
      %1161 = vst [vmem:[#allocation3] sm:$0xff] %v1160
    $region30: #{tpu_custom_call.1} parent=1 // loop_footer
      %s1117 = sadd.s32 %s1115, 1
    $region31: #{tpu_custom_call.1} parent=1 // loop_footer_branch
      %1114 = sbr.rel target = $region27
    $region32: #{tpu_custom_call.1} parent=1 // loop_exit
      _
    %v1162 = vld [vmem:[#allocation3] sm:$0xff]
    %v1163 = vmul.u32 %v1099, 2
    %1164 = vset.pattern.permute.xlu0 0
    %1165 = vperm.xlu0 %1164, %v1163
    %v1166 = vpop.permute.xlu0 %1165
    %vm1167 = vcmp.eq.s32.totalorder %v1089, %v1166
    %v1168 = vsel %vm1167, %v1162, -1e+30
    %1169 = vmax.xlane.f32.xlu0 %v1168
    %v1170 = vpop.xlane.xlu0 %1169
    %v1171 = vsub.s32 %v1163, 1
    %1172 = vset.pattern.permute.xlu0 0
    %1173 = vperm.xlu0 %1172, %v1171
    %v1174 = vpop.permute.xlu0 %1173
    %vm1175 = vcmp.eq.s32.totalorder %v1089, %v1174
    %v1176 = vsel %vm1175, %v1162, -1e+30
    %1177 = vmax.xlane.f32.xlu0 %v1176
    %v1178 = vpop.xlane.xlu0 %1177
    %v1179 = vmax.f32 %v1170, %v1178
    %v1180 = vsub.f32 %v1170, %v1179
    %v1181 = vmul.f32 %v1180, 1.442695
    %v1182 = vpow.pop %v1181
    %v1183 = vsub.f32 %v1178, %v1179
    %v1184 = vmul.f32 %v1183, 1.442695
    %v1185 = vpow.pop %v1184
    %v1186 = vadd.f32 %v1182, %v1185
    %v1187 = vlog2.pop %v1186
    %v1188 = vmul.f32 %v1187, 0.6931472
    %v1189 = vadd.f32 %v1179, %v1188
    %v1190 = vsub.f32 0.0, %v1189
    %vm1191 = vcmp.gt.s32.totalorder %v1099, 1
    %v1192 = vsel %vm1191, %v1099, 1
    %v1193 = vcvt.s32.f32 %v1192
    %v1194 = vrcp.pop %v1193
    %v1195 = vmul.f32 %v1190, %v1194
    %vm1196 = vcmask 7168
    %1197 = vst.msk [vmem:[%s6] sm:$0xff] %vm1196, %v1195
    // Predicated region
    $region33: #{tpu_custom_call.1} parent=1 // pred_check
      _
    $region34: #{tpu_custom_call.1} parent=1 // pred_check_branch
      %1199 = sbr.rel (0) target = $region36
    $region35: #{tpu_custom_call.1} parent=1 // pred_region
      _
    $region36: #{tpu_custom_call.1} parent=1 // pred_fallthru
      _
    // Predicated region
    $region37: #{tpu_custom_call.1} parent=1 // pred_check
      _
    $region38: #{tpu_custom_call.1} parent=1 // pred_check_branch
      %1201 = sbr.rel (0) target = $region40
    $region39: #{tpu_custom_call.1} parent=1 // pred_region
      _
    $region40: #{tpu_custom_call.1} parent=1 // pred_fallthru
      _
    %1202 = vsyncpa [#allocation7], 1

</llo_original>
